<compile_context>
chip_gen: v7x
topology: tpu7x:2x2x1
jax: 0.10.0
libtpu: 0.0.40
codegen_flags: <defaults>
</compile_context>

<pallas_src>
import jax
import jax.numpy as jnp
from jax.experimental import pallas as pl
from jax.experimental.pallas import tpu as pltpu


def dti_distmtx_kernel(sel_p_ref, prot_ref, sel_c_ref, graph_ref,
                       wcat_ref, bcat_ref, wf_ref, out_ref):
    f32, bf16 = jnp.float32, jnp.bfloat16
    sel_p = sel_p_ref[...]          # (Bt, Lp, Lp_full)   bf16
    prot = prot_ref[...]            # (Bt, Lp_full, Dp)   bf16
    sel_c = sel_c_ref[...]          # (Bt, Lc, Ln)        bf16
    graph = graph_ref[...]          # (Bt, Ln, Demb)      bf16
    w_cat = wcat_ref[...]           # (Dp, 2*Demb) bf16 == [wt^T | wt^T @ U]
    b_cat = bcat_ref[...]           # (1, 2*Demb)  f32  == [bt   | bt @ U]
    wf = wf_ref[...]                # (C, Demb)    bf16 == ffn.weight

    Bt, Lp, _ = sel_p.shape
    Demb = graph.shape[-1]
    Lc = sel_c.shape[1]
    C = wf.shape[0]

    # Binding-site selection bmm's (torch.bmm), batched over Bt; bf16 in, f32 acc.
    q0 = jnp.einsum('bip,bpd->bid', sel_p, prot,
                    preferred_element_type=f32)            # (Bt, Lp, Dp)
    A = jnp.einsum('bjn,bnd->bjd', sel_c, graph,
                   preferred_element_type=f32)             # (Bt, Lc, Demb)
    A_bf = A.astype(bf16)

    # Fused [Q | Q@U] GEMM stacked over Bt*Lp rows: one LHS push, 2*Demb-wide N.
    q0f = q0.reshape(Bt * Lp, -1).astype(bf16)             # (Bt*Lp, Dp)
    qqu = jnp.dot(q0f, w_cat, preferred_element_type=f32) + b_cat
    Q = qqu[:, :Demb].reshape(Bt, Lp, Demb)                # prot_transform out
    qu = qqu[:, Demb:].reshape(Bt, Lp, Demb)               # == Q @ U

    # Attentive pooling: G = tanh(Q U A^T), masked softmax over sequence axes.
    G = jnp.tanh(jnp.einsum('bid,bjd->bij', qu.astype(bf16), A_bf,
                            preferred_element_type=f32))   # (Bt, Lp, Lc)
    neg = f32(-1e9)
    g_q = jnp.max(G, axis=2, keepdims=True)                # (Bt, Lp, 1)
    g_a = jnp.max(G, axis=1, keepdims=True)                # (Bt, 1, Lc)
    g_q = jnp.where(g_q == 0.0, neg, g_q)                  # masked_fill(g==0)
    g_a = jnp.where(g_a == 0.0, neg, g_a)

    eq = jnp.exp(g_q - jnp.max(g_q, axis=1, keepdims=True))
    sigma_q = eq * pl.reciprocal(jnp.sum(eq, axis=1, keepdims=True), approx=True)
    ea = jnp.exp(g_a - jnp.max(g_a, axis=2, keepdims=True))
    sigma_a = ea * pl.reciprocal(jnp.sum(ea, axis=2, keepdims=True), approx=True)

    prot_vec = (Q * sigma_q).astype(bf16)                  # (Bt, Lp, Demb)

    # Fused pairwise feature + ffn (bias added on host), all classes in ONE
    # batched matmul (class-scaled copies kept in bf16 to halve VMEM pressure):
    # out[b, c*Lp+i, j] = sigma_a[b,j] * sum_d prot_vec[b,i,d]*wf[c,d]*A[b,j,d]
    # TODO(synk): for large C, switch to a fori_loop over classes / scale the
    # smaller operand (A side) instead of concatenating C copies.
    scaled = jnp.concatenate([prot_vec * wf[c:c + 1, :] for c in range(C)],
                             axis=1)                       # (Bt, C*Lp, Demb) bf16
    m = jnp.einsum('bmd,bjd->bmj', scaled, A_bf,
                   preferred_element_type=f32)             # (Bt, C*Lp, Lc)
    # Lane-dense store: flatten trailing dims so the out block last dim is wide.
    out_ref[...] = (m * sigma_a).reshape(Bt, C * Lp * Lc)


def _round_up(x, m):
    return (x + m - 1) // m * m


def dti_distmtx_forward(sel_prot, prot_emb, sel_chem, graph_repr,
                        wt_t, bt, u, wf, bf):
    """prot_emb: (B, Lp_full, Dp) protein-LM embeddings (CLS/SEP removed).
       graph_repr: (B, Ln, Demb) densified GNN node embeddings.
       wt_t: (Dp, Demb) = prot_transform.weight.T ; bt: (Demb,)
       u: (Demb, Demb) AttentivePooling2.U ; wf: (C, Demb) ffn.weight ; bf: (C,)"""
    B, Lp_bs, Lp_full = sel_prot.shape
    Dp = prot_emb.shape[-1]
    _, Lc_bs, Ln = sel_chem.shape
    Demb = graph_repr.shape[-1]
    C = wf.shape[0]
    f32, bf16 = jnp.float32, jnp.bfloat16
    f32b, bf16b = 4, 2

    # ---- generation-aware VMEM budget & batch tile -------------------------
    try:
        vmem_cap = int(pltpu.get_tpu_info().vmem_capacity_bytes)
    except Exception:
        vmem_cap = 64 * 1024 * 1024                        # conservative fallback
    vmem_limit = min(int(vmem_cap * 0.78), 100 * 1024 * 1024)   # ~50MiB v7x, ~100MiB v5e/v6e
    vmem_budget = int(vmem_limit * 0.70)

    # per-batch-element footprint: double-buffered streamed inputs + output
    # block + in-kernel intermediates (2x fudge for compiler temporaries).
    stream_b = 2 * bf16b * (Lp_bs * Lp_full + Lp_full * Dp + Lc_bs * Ln + Ln * Demb)
    out_b = 2 * f32b * C * Lp_bs * Lc_bs
    inter_b = (f32b * (Lp_bs * Dp + 2 * Lp_bs * Demb + Lc_bs * Demb
                       + 3 * Lp_bs * Lc_bs + Lp_bs * Demb + C * Lp_bs * Lc_bs)
               + bf16b * (Lp_bs * Dp + Lp_bs * Demb + Lc_bs * Demb + C * Lp_bs * Demb))
    per_b = stream_b + out_b + 2 * inter_b

    Bt = max(8, (vmem_budget // max(per_b, 1)) // 8 * 8)   # multiple of 8 (sublanes)
    Bt = min(Bt, 256)                                      # bound per-step latency
    Bt = min(Bt, _round_up(B, 8))
    B_pad = _round_up(B, Bt)
    if B_pad // Bt == 1 and Bt >= 16:                      # >=2 steps -> both TCs on v7x
        Bt = max(8, (Bt // 2) // 8 * 8)
        B_pad = _round_up(B, Bt)
    grid = B_pad // Bt

    # ---- host-side parameter prep (tiny) -----------------------------------
    wt32 = wt_t.astype(f32)                                # (Dp, Demb)
    u32 = u.astype(f32)                                    # (Demb, Demb)
    bt2 = bt.reshape(1, Demb).astype(f32)                  # (1, Demb)
    w_cat = jnp.concatenate([wt32, wt32 @ u32], axis=1).astype(bf16)  # (Dp, 2*Demb)
    b_cat = jnp.concatenate([bt2, bt2 @ u32], axis=1)                 # (1, 2*Demb) f32
    wf_bf = wf.astype(bf16)                                # (C, Demb)

    # ---- pad batch (cheap) instead of shrinking the tile --------------------
    sp, pe, sc, gr = (x.astype(bf16) for x in (sel_prot, prot_emb, sel_chem, graph_repr))
    if B_pad > B:
        pad = B_pad - B
        sp = jnp.pad(sp, ((0, pad), (0, 0), (0, 0)))
        pe = jnp.pad(pe, ((0, pad), (0, 0), (0, 0)))
        sc = jnp.pad(sc, ((0, pad), (0, 0), (0, 0)))
        gr = jnp.pad(gr, ((0, pad), (0, 0), (0, 0)))

    out = pl.pallas_call(
        dti_distmtx_kernel,
        out_shape=jax.ShapeDtypeStruct((B_pad, C * Lp_bs * Lc_bs), f32),
        grid=(grid,),
        in_specs=[
            pl.BlockSpec((Bt, Lp_bs, Lp_full), lambda b: (b, 0, 0)),
            pl.BlockSpec((Bt, Lp_full, Dp), lambda b: (b, 0, 0)),
            pl.BlockSpec((Bt, Lc_bs, Ln), lambda b: (b, 0, 0)),
            pl.BlockSpec((Bt, Ln, Demb), lambda b: (b, 0, 0)),
            pl.BlockSpec((Dp, 2 * Demb), lambda b: (0, 0)),
            pl.BlockSpec((1, 2 * Demb), lambda b: (0, 0)),
            pl.BlockSpec((C, Demb), lambda b: (0, 0)),
        ],
        out_specs=pl.BlockSpec((Bt, C * Lp_bs * Lc_bs), lambda b: (b, 0)),
        compiler_params=pltpu.CompilerParams(
            dimension_semantics=("parallel",),             # batch steps independent
            vmem_limit_bytes=vmem_limit,
        ),
    )(sp, pe, sc, gr, w_cat, b_cat, wf_bf)

    # (B, C*Lp*Lc) -> (B, C, Lp, Lc) -> PyTorch layout (B, Lp, Lc, C); add ffn bias.
    out = out[:B].reshape(B, C, Lp_bs, Lc_bs)
    return jnp.transpose(out, (0, 2, 3, 1)) + bf.astype(f32)


def reference_forward(sel_prot, prot_emb, sel_chem, graph_repr, wt_t, bt, u, wf, bf):
    """Pure-JAX reference matching the PyTorch module op order. Mirrors the
       kernel's precision policy (bf16 streamed activations / matmul operands,
       f32 accumulation) so the comparison isolates kernel bugs, not dtype."""
    f32, bf16 = jnp.float32, jnp.bfloat16
    sp, pe, sc, gr = (x.astype(bf16) for x in (sel_prot, prot_emb, sel_chem, graph_repr))
    wt_b, u_b = wt_t.astype(bf16), u.astype(bf16)
    bt32, wf32, bf32 = bt.astype(f32), wf.astype(f32), bf.astype(f32)

    Q0 = jnp.einsum('bij,bjd->bid', sp, pe, preferred_element_type=f32)
    Q = jnp.einsum('bid,de->bie', Q0.astype(bf16), wt_b, preferred_element_type=f32) + bt32
    A = jnp.einsum('bij,bjd->bid', sc, gr, preferred_element_type=f32)
    QU = jnp.einsum('bid,de->bie', Q.astype(bf16), u_b, preferred_element_type=f32)
    G = jnp.tanh(jnp.einsum('bie,bje->bij', QU.astype(bf16), A.astype(bf16),
                            preferred_element_type=f32))
    g_q = jnp.where(G.max(axis=2) == 0, -1e9, G.max(axis=2))
    g_a = jnp.where(G.max(axis=1) == 0, -1e9, G.max(axis=1))
    sigma_q = jax.nn.softmax(g_q, axis=1)                  # F.softmax implicit dim=1
    sigma_a = jax.nn.softmax(g_a, axis=1)
    prot_vec = Q * sigma_q[:, :, None]
    chem_vec = A * sigma_a[:, :, None]
    feat = prot_vec[:, :, None, :] * chem_vec[:, None, :, :]
    return jnp.einsum('bijd,cd->bijc', feat, wf32, preferred_element_type=f32) + bf32


if __name__ == "__main__":
    # Small synthetic shapes consistent with the module's forward:
    B = 16           # batch (padded/tiled internally; grid >= 2 for v7x)
    Lp_tok = 14      # tokenized protein length (incl. CLS/SEP)
    Lp_bs = 8        # binding-site residues selected
    Dp = 16          # protein descriptor dim ("dim" in the module, orig 20)
    Demb = 32        # shared embedding dim (orig 300)
    Ln = 10          # chem graph nodes (dense-batched)
    Lc_bs = 8        # selected chem atoms
    C = 2            # num_class (pred_mode='binary')

    key = jax.random.PRNGKey(0)
    ks = jax.random.split(key, 9)

    # Stand-ins for the external encoders' outputs.
    prot_lm_out = jax.random.normal(ks[0], (B, Lp_tok, Dp), jnp.float32)
    prot_emb = prot_lm_out[:, 1:-1, :]                      # [:, 1:-1, :] strip
    graph_repr = jax.random.normal(ks[1], (B, Ln, Demb), jnp.float32)
    sel_prot = jax.random.uniform(ks[2], (B, Lp_bs, Lp_tok - 2), jnp.float32)
    sel_chem = jax.random.uniform(ks[3], (B, Lc_bs, Ln), jnp.float32)

    # Parameters (shapes from __init__).
    wt_t = 0.1 * jax.random.normal(ks[4], (Dp, Demb), jnp.float32)   # Linear(Dp,Demb).weight.T
    bt = 0.1 * jax.random.normal(ks[5], (Demb,), jnp.float32)
    # AttentivePooling2.U is nn.Parameter(zeros); init non-zero so the path is exercised.
    u = 0.05 * jax.random.normal(ks[6], (Demb, Demb), jnp.float32)
    wf = 0.1 * jax.random.normal(ks[7], (C, Demb), jnp.float32)      # ffn.weight (C, Demb)
    bf = 0.1 * jax.random.normal(ks[8], (C,), jnp.float32)

    logits = dti_distmtx_forward(sel_prot, prot_emb, sel_chem, graph_repr,
                                 wt_t, bt, u, wf, bf)
    logits = jax.block_until_ready(logits)

    ref = reference_forward(sel_prot, prot_emb, sel_chem, graph_repr,
                            wt_t, bt, u, wf, bf)
    assert logits.shape == (B, Lp_bs, Lc_bs, C), logits.shape
    max_err = float(jnp.max(jnp.abs(logits - ref)))
    # bf16 MXU operands + approx reciprocal + [wt|wt@U] precompute reordering
    # => loose-ish tolerance vs. the op-order reference.
    assert jnp.allclose(logits, ref, rtol=5e-2, atol=1e-2), max_err
    print("KERNEL_OK")
</pallas_src>

<mosaic_0001>
module attributes {stable_mosaic.version = 11 : i64} {
  func.func @dti_distmtx_kernel(%arg0: i32, %arg1: memref<8x8x12xbf16, #tpu.memory_space<vmem>>, %arg2: memref<8x12x16xbf16, #tpu.memory_space<vmem>>, %arg3: memref<8x8x10xbf16, #tpu.memory_space<vmem>>, %arg4: memref<8x10x32xbf16, #tpu.memory_space<vmem>>, %arg5: memref<16x64xbf16, #tpu.memory_space<vmem>>, %arg6: memref<1x64xf32, #tpu.memory_space<vmem>>, %arg7: memref<2x32xbf16, #tpu.memory_space<vmem>>, %arg8: memref<8x128xf32, #tpu.memory_space<vmem>>) attributes {dimension_semantics = [#tpu.dimension_semantics<parallel>], iteration_bounds = array<i64: 2>, scalar_prefetch = 0 : i64, scratch_operands = 0 : i64, tpu.core_type = #tpu.core_type<tc>, window_params = [{transform_indices = @transform_0, window_bounds = array<i64: 8, 8, 12>}, {transform_indices = @transform_1, window_bounds = array<i64: 8, 12, 16>}, {transform_indices = @transform_2, window_bounds = array<i64: 8, 8, 10>}, {transform_indices = @transform_3, window_bounds = array<i64: 8, 10, 32>}, {pipeline_mode = #tpu.pipeline_mode<synchronous>, transform_indices = @transform_4, window_bounds = array<i64: 16, 64>}, {pipeline_mode = #tpu.pipeline_mode<synchronous>, transform_indices = @transform_5, window_bounds = array<i64: 1, 64>}, {pipeline_mode = #tpu.pipeline_mode<synchronous>, transform_indices = @transform_6, window_bounds = array<i64: 2, 32>}, {transform_indices = @transform_7, window_bounds = array<i64: 8, 128>}]} {
    %c0 = arith.constant 0 : index
    %c0_0 = arith.constant 0 : index
    %c0_1 = arith.constant 0 : index
    %0 = vector.load %arg1[%c0, %c0_0, %c0_1] : memref<8x8x12xbf16, #tpu.memory_space<vmem>>, vector<8x8x12xbf16>
    %c0_2 = arith.constant 0 : index
    %c0_3 = arith.constant 0 : index
    %c0_4 = arith.constant 0 : index
    %1 = vector.load %arg2[%c0_2, %c0_3, %c0_4] : memref<8x12x16xbf16, #tpu.memory_space<vmem>>, vector<8x12x16xbf16>
    %c0_5 = arith.constant 0 : index
    %c0_6 = arith.constant 0 : index
    %c0_7 = arith.constant 0 : index
    %2 = vector.load %arg3[%c0_5, %c0_6, %c0_7] : memref<8x8x10xbf16, #tpu.memory_space<vmem>>, vector<8x8x10xbf16>
    %c0_8 = arith.constant 0 : index
    %c0_9 = arith.constant 0 : index
    %c0_10 = arith.constant 0 : index
    %3 = vector.load %arg4[%c0_8, %c0_9, %c0_10] : memref<8x10x32xbf16, #tpu.memory_space<vmem>>, vector<8x10x32xbf16>
    %c0_11 = arith.constant 0 : index
    %c0_12 = arith.constant 0 : index
    %4 = vector.load %arg5[%c0_11, %c0_12] : memref<16x64xbf16, #tpu.memory_space<vmem>>, vector<16x64xbf16>
    %c0_13 = arith.constant 0 : index
    %c0_14 = arith.constant 0 : index
    %5 = vector.load %arg6[%c0_13, %c0_14] : memref<1x64xf32, #tpu.memory_space<vmem>>, vector<1x64xf32>
    %c0_15 = arith.constant 0 : index
    %c0_16 = arith.constant 0 : index
    %6 = vector.load %arg7[%c0_15, %c0_16] : memref<2x32xbf16, #tpu.memory_space<vmem>>, vector<2x32xbf16>
    "tpu.trace_start"() <{level = 10 : i32, message = "bip,bpd->bid"}> : () -> ()
    %cst = arith.constant dense<0.000000e+00> : vector<8x8x16xf32>
    %7 = tpu.matmul %0, %1, %cst {dimension_numbers = #tpu.dot_dimension_numbers<[2], [1], [1], [2], [0, 0, 0, 1, 1, 2], [0], [0]>} : vector<8x8x12xbf16>, vector<8x12x16xbf16>, vector<8x8x16xf32> -> vector<8x8x16xf32>
    "tpu.trace_stop"() : () -> ()
    "tpu.trace_start"() <{level = 10 : i32, message = "bjn,bnd->bjd"}> : () -> ()
    %cst_17 = arith.constant dense<0.000000e+00> : vector<8x8x32xf32>
    %8 = tpu.matmul %2, %3, %cst_17 {dimension_numbers = #tpu.dot_dimension_numbers<[2], [1], [1], [2], [0, 0, 0, 1, 1, 2], [0], [0]>} : vector<8x8x10xbf16>, vector<8x10x32xbf16>, vector<8x8x32xf32> -> vector<8x8x32xf32>
    "tpu.trace_stop"() : () -> ()
    %9 = arith.truncf %8 : vector<8x8x32xf32> to vector<8x8x32xbf16>
    %10 = vector.shape_cast %7 : vector<8x8x16xf32> to vector<64x16xf32>
    %11 = arith.truncf %10 : vector<64x16xf32> to vector<64x16xbf16>
    %cst_18 = arith.constant dense<0.000000e+00> : vector<64x64xf32>
    %12 = tpu.matmul %11, %4, %cst_18 {dimension_numbers = #tpu.dot_dimension_numbers<[1], [0], [0], [1], [0, 0, 1, 1], [], []>} : vector<64x16xbf16>, vector<16x64xbf16>, vector<64x64xf32> -> vector<64x64xf32>
    %13 = vector.broadcast %5 : vector<1x64xf32> to vector<64x64xf32>
    %14 = arith.addf %12, %13 : vector<64x64xf32>
    %15 = vector.extract_strided_slice %14 {offsets = [0, 0], sizes = [64, 32], strides = [1, 1]} : vector<64x64xf32> to vector<64x32xf32>
    %16 = vector.shape_cast %15 : vector<64x32xf32> to vector<8x8x32xf32>
    %17 = vector.extract_strided_slice %14 {offsets = [0, 32], sizes = [64, 32], strides = [1, 1]} : vector<64x64xf32> to vector<64x32xf32>
    %18 = vector.shape_cast %17 : vector<64x32xf32> to vector<8x8x32xf32>
    %19 = arith.truncf %18 : vector<8x8x32xf32> to vector<8x8x32xbf16>
    "tpu.trace_start"() <{level = 10 : i32, message = "bid,bjd->bij"}> : () -> ()
    %cst_19 = arith.constant dense<0.000000e+00> : vector<8x8x8xf32>
    %20 = tpu.matmul %19, %9, %cst_19 {dimension_numbers = #tpu.dot_dimension_numbers<[2], [2], [1], [1], [0, 0, 0, 1, 1, 1], [0], [0]>} : vector<8x8x32xbf16>, vector<8x8x32xbf16>, vector<8x8x8xf32> -> vector<8x8x8xf32>
    "tpu.trace_stop"() : () -> ()
    %21 = math.tanh %20 : vector<8x8x8xf32>
    %cst_20 = arith.constant dense<0xFF800000> : vector<8x8xf32>
    %22 = vector.multi_reduction <maximumf>, %21, %cst_20 [2] : vector<8x8x8xf32> to vector<8x8xf32>
    %23 = vector.shape_cast %22 : vector<8x8xf32> to vector<8x8x1xf32>
    %cst_21 = arith.constant dense<0xFF800000> : vector<8x8xf32>
    %24 = vector.multi_reduction <maximumf>, %21, %cst_21 [1] : vector<8x8x8xf32> to vector<8x8xf32>
    %25 = vector.shape_cast %24 : vector<8x8xf32> to vector<8x1x8xf32>
    %cst_22 = arith.constant 0.000000e+00 : f32
    %26 = vector.broadcast %cst_22 : f32 to vector<8x8x1xf32>
    %27 = arith.cmpf oeq, %23, %26 : vector<8x8x1xf32>
    %cst_23 = arith.constant -1.000000e+09 : f32
    %28 = vector.broadcast %cst_23 : f32 to vector<8x8x1xf32>
    %29 = arith.select %27, %28, %23 : vector<8x8x1xi1>, vector<8x8x1xf32>
    %cst_24 = arith.constant 0.000000e+00 : f32
    %30 = vector.broadcast %cst_24 : f32 to vector<8x1x8xf32>
    %31 = arith.cmpf oeq, %25, %30 : vector<8x1x8xf32>
    %cst_25 = arith.constant -1.000000e+09 : f32
    %32 = vector.broadcast %cst_25 : f32 to vector<8x1x8xf32>
    %33 = arith.select %31, %32, %25 : vector<8x1x8xi1>, vector<8x1x8xf32>
    %cst_26 = arith.constant dense<0xFF800000> : vector<8x1xf32>
    %34 = vector.multi_reduction <maximumf>, %29, %cst_26 [1] : vector<8x8x1xf32> to vector<8x1xf32>
    %35 = vector.shape_cast %34 : vector<8x1xf32> to vector<8x1x1xf32>
    %36 = vector.broadcast %35 : vector<8x1x1xf32> to vector<8x8x1xf32>
    %37 = arith.subf %29, %36 : vector<8x8x1xf32>
    %38 = math.exp %37 : vector<8x8x1xf32>
    %cst_27 = arith.constant dense<0.000000e+00> : vector<8x1xf32>
    %39 = vector.multi_reduction <add>, %38, %cst_27 [1] : vector<8x8x1xf32> to vector<8x1xf32>
    %40 = vector.shape_cast %39 : vector<8x1xf32> to vector<8x1x1xf32>
    %41 = tpu.reciprocal %40 {approx = true} : vector<8x1x1xf32> -> vector<8x1x1xf32>
    %42 = vector.broadcast %41 : vector<8x1x1xf32> to vector<8x8x1xf32>
    %43 = arith.mulf %38, %42 : vector<8x8x1xf32>
    %cst_28 = arith.constant dense<0xFF800000> : vector<8x1xf32>
    %44 = vector.multi_reduction <maximumf>, %33, %cst_28 [2] : vector<8x1x8xf32> to vector<8x1xf32>
    %45 = vector.shape_cast %44 : vector<8x1xf32> to vector<8x1x1xf32>
    %46 = vector.broadcast %45 : vector<8x1x1xf32> to vector<8x1x8xf32>
    %47 = arith.subf %33, %46 : vector<8x1x8xf32>
    %48 = math.exp %47 : vector<8x1x8xf32>
    %cst_29 = arith.constant dense<0.000000e+00> : vector<8x1xf32>
    %49 = vector.multi_reduction <add>, %48, %cst_29 [2] : vector<8x1x8xf32> to vector<8x1xf32>
    %50 = vector.shape_cast %49 : vector<8x1xf32> to vector<8x1x1xf32>
    %51 = tpu.reciprocal %50 {approx = true} : vector<8x1x1xf32> -> vector<8x1x1xf32>
    %52 = vector.broadcast %51 : vector<8x1x1xf32> to vector<8x1x8xf32>
    %53 = arith.mulf %48, %52 : vector<8x1x8xf32>
    %54 = vector.broadcast %43 : vector<8x8x1xf32> to vector<8x8x32xf32>
    %55 = arith.mulf %16, %54 : vector<8x8x32xf32>
    %56 = arith.truncf %55 : vector<8x8x32xf32> to vector<8x8x32xbf16>
    %57 = vector.extract_strided_slice %6 {offsets = [0, 0], sizes = [1, 32], strides = [1, 1]} : vector<2x32xbf16> to vector<1x32xbf16>
    %58 = vector.shape_cast %57 : vector<1x32xbf16> to vector<1x1x32xbf16>
    %59 = vector.broadcast %58 : vector<1x1x32xbf16> to vector<8x8x32xbf16>
    %60 = arith.mulf %56, %59 : vector<8x8x32xbf16>
    %61 = vector.extract_strided_slice %6 {offsets = [1, 0], sizes = [1, 32], strides = [1, 1]} : vector<2x32xbf16> to vector<1x32xbf16>
    %62 = vector.shape_cast %61 : vector<1x32xbf16> to vector<1x1x32xbf16>
    %63 = vector.broadcast %62 : vector<1x1x32xbf16> to vector<8x8x32xbf16>
    %64 = arith.mulf %56, %63 : vector<8x8x32xbf16>
    %65 = tpu.concatenate %60, %64 in 1 : vector<8x8x32xbf16>, vector<8x8x32xbf16> -> vector<8x16x32xbf16>
    "tpu.trace_start"() <{level = 10 : i32, message = "bmd,bjd->bmj"}> : () -> ()
    %cst_30 = arith.constant dense<0.000000e+00> : vector<8x16x8xf32>
    %66 = tpu.matmul %65, %9, %cst_30 {dimension_numbers = #tpu.dot_dimension_numbers<[2], [2], [1], [1], [0, 0, 0, 1, 1, 1], [0], [0]>} : vector<8x16x32xbf16>, vector<8x8x32xbf16>, vector<8x16x8xf32> -> vector<8x16x8xf32>
    "tpu.trace_stop"() : () -> ()
    %67 = vector.broadcast %53 : vector<8x1x8xf32> to vector<8x16x8xf32>
    %68 = arith.mulf %66, %67 : vector<8x16x8xf32>
    %69 = vector.shape_cast %68 : vector<8x16x8xf32> to vector<8x128xf32>
    %c0_31 = arith.constant 0 : index
    %c0_32 = arith.constant 0 : index
    %70 = vector.load %arg8[%c0_31, %c0_32] : memref<8x128xf32, #tpu.memory_space<vmem>>, vector<8x128xf32>
    tpu.vector_store %arg8[%c0_31, %c0_32], %69 {strides = array<i32>} : memref<8x128xf32, #tpu.memory_space<vmem>>, vector<8x128xf32>,
    return
  }
  func.func @transform_0(%arg0: i32) -> (i32, i32, i32) {
    %c0_i32 = arith.constant 0 : i32
    %c0_i32_0 = arith.constant 0 : i32
    %c0_i32_1 = arith.constant 0 : i32
    return %arg0, %c0_i32, %c0_i32_0 : i32, i32, i32
  }
  func.func @transform_1(%arg0: i32) -> (i32, i32, i32) {
    %c0_i32 = arith.constant 0 : i32
    %c0_i32_0 = arith.constant 0 : i32
    %c0_i32_1 = arith.constant 0 : i32
    return %arg0, %c0_i32, %c0_i32_0 : i32, i32, i32
  }
  func.func @transform_2(%arg0: i32) -> (i32, i32, i32) {
    %c0_i32 = arith.constant 0 : i32
    %c0_i32_0 = arith.constant 0 : i32
    %c0_i32_1 = arith.constant 0 : i32
    return %arg0, %c0_i32, %c0_i32_0 : i32, i32, i32
  }
  func.func @transform_3(%arg0: i32) -> (i32, i32, i32) {
    %c0_i32 = arith.constant 0 : i32
    %c0_i32_0 = arith.constant 0 : i32
    %c0_i32_1 = arith.constant 0 : i32
    return %arg0, %c0_i32, %c0_i32_0 : i32, i32, i32
  }
  func.func @transform_4(%arg0: i32) -> (i32, i32) {
    %c0_i32 = arith.constant 0 : i32
    %c0_i32_0 = arith.constant 0 : i32
    %c0_i32_1 = arith.constant 0 : i32
    return %c0_i32, %c0_i32_0 : i32, i32
  }
  func.func @transform_5(%arg0: i32) -> (i32, i32) {
    %c0_i32 = arith.constant 0 : i32
    %c0_i32_0 = arith.constant 0 : i32
    %c0_i32_1 = arith.constant 0 : i32
    return %c0_i32, %c0_i32_0 : i32, i32
  }
  func.func @transform_6(%arg0: i32) -> (i32, i32) {
    %c0_i32 = arith.constant 0 : i32
    %c0_i32_0 = arith.constant 0 : i32
    %c0_i32_1 = arith.constant 0 : i32
    return %c0_i32, %c0_i32_0 : i32, i32
  }
  func.func @transform_7(%arg0: i32) -> (i32, i32) {
    %c0_i32 = arith.constant 0 : i32
    %c0_i32_0 = arith.constant 0 : i32
    return %arg0, %c0_i32 : i32, i32
  }
}

</mosaic_0001>

<llo_original>
// kernel: tpu_custom_call.1
$region0: #{tpu_custom_call.1}
  #allocation0 [shape = 'u32[]', space=smem, size = 0x4, offset = 0x4, fixed_abs, tag = 'smem constant byte address 0x4 - core index']
  #allocation1 [shape = 'u32[144,128]{1,0:T(1,128)}', space=vmem, size = 0x12000, scoped, tag = 'internal scratch']
  %s0 = inlined_call_operand.vmem [shape: bf16[16,8,12], index: 0, kind: input, shape index: {}]
  %s1 = inlined_call_operand.vmem [shape: bf16[16,12,16], index: 1, kind: input, shape index: {}]
  %s2 = inlined_call_operand.vmem [shape: bf16[16,8,10], index: 2, kind: input, shape index: {}]
  %s3 = inlined_call_operand.vmem [shape: bf16[16,10,32], index: 3, kind: input, shape index: {}]
  %s4 = inlined_call_operand.vmem [shape: bf16[16,64], index: 4, kind: input, shape index: {}]
  %s5 = inlined_call_operand.vmem [shape: f32[1,64], index: 5, kind: input, shape index: {}]
  %s6 = inlined_call_operand.vmem [shape: bf16[2,32], index: 6, kind: input, shape index: {}]
  %s7 = inlined_call_operand.hbm [shape: f32[16,128], index: 7, kind: output, shape index: {}]
  %s8 = sld [smem:[#allocation0]]
  $region61: #{tpu_custom_call.1} parent=0
    _
  %s10 = ssub.s32 1, %s8
  %s11 = scalar_select 0, %s10, %s8
  $region1: #{tpu_custom_call.1} parent=0
    #allocation2 [shape = 'u8[8192]{0}', space=vmem, size = 0x2000, scoped, tag = 'output window, operand 0']
    #allocation3 [shape = 's32[2]{0}', space=sflag, size = 0x8, scoped, tag = 'scoped memory for tpu_custom_call.1']
    %12 = vsyncpa [#allocation3], 0
    %s13 = scalar_lea.sflag [#allocation3], 1
    %14 = vsyncpa %s13, 0
    loop: start=0, step=1, limit=4
    $region2: #{tpu_custom_call.1} parent=1 // loop_pre_header
      _
    $region3: #{tpu_custom_call.1} parent=1 // loop_header
      %s16 = sphi 0, %s20
      %p17 = scmp.ge.s32.totalorder %s16, 4
      %s26 = sphi 0, %s28
      %s29 = sphi 0, %s26
      %s30 = sphi 0, %s29
      %s46 = sphi 0, %s30
      %s52 = sphi 0, %s54
      %s55 = sphi 0, %s52
      %s56 = sphi 0, %s55
      %s72 = sphi 0, %s56
      %s78 = sphi 0, %s80
      %s81 = sphi 0, %s78
      %s82 = sphi 0, %s81
      %s98 = sphi 0, %s82
      %s104 = sphi 0, %s106
      %s107 = sphi 0, %s104
      %s108 = sphi 0, %s107
      %s124 = sphi 0, %s108
      %s128 = sphi 0, %s128
      %s130 = sphi 0, %s128
      %s131 = sphi 0, %s130
      %s145 = sphi 0, %s131
      %s149 = sphi 0, %s149
      %s151 = sphi 0, %s149
      %s152 = sphi 0, %s151
      %s166 = sphi 0, %s152
      %s170 = sphi 0, %s170
      %s172 = sphi 0, %s170
      %s173 = sphi 0, %s172
      %s187 = sphi 0, %s173
      %s193 = sphi 0, %s195
      %s196 = sphi 0, %s193
      %s197 = sphi 0, %s196
      %s213 = sphi 0, %s197
    $region4: #{tpu_custom_call.1} parent=1 // loop_header_branch
      %19 = sbr.rel (%p17) target = $region8
    $region5: #{tpu_custom_call.1} parent=1 // loop_body
      %s21 = ssub.s32 %s16, 1
      %s22 = ssub.s32 %s16, 2
      %s23 = sadd.s32 %s16, 1
      %s24 = ssub.s32 %s16, %s23
      %p25 = scmp.eq.s32.totalorder %s24, 0
      %s27 = sadd.s32 %s26, 1
      %s28 = scalar_select %p25, %s26, %s27
      %p31 = pneg %p25
      %p32 = scmp.eq.s32.totalorder %s16, 1
      %p33 = por %p31, %p32
      %p34 = scmp.ne.s32.totalorder %s26, %s29
      %p35 = scmp.eq.s32.totalorder %s16, 0
      %p36 = por %p34, %p35
      %p37 = scmp.ne.s32.totalorder %s26, %s29
      %p38 = scmp.eq.s32.totalorder %s21, 1
      %p39 = por %p37, %p38
      %p40 = scmp.ne.s32.totalorder %s29, %s30
      %p41 = scmp.eq.s32.totalorder %s21, 0
      %p42 = por %p40, %p41
      %p43 = scmp.ne.s32.totalorder %s29, %s30
      %p44 = scmp.eq.s32.totalorder %s22, 1
      %p45 = por %p43, %p44
      %p47 = scmp.ne.s32.totalorder %s30, %s46
      %p48 = scmp.eq.s32.totalorder %s22, 0
      %p49 = por %p47, %p48
      %s50 = ssub.s32 %s16, %s23
      %p51 = scmp.eq.s32.totalorder %s50, 0
      %s53 = sadd.s32 %s52, 1
      %s54 = scalar_select %p51, %s52, %s53
      %p57 = pneg %p51
      %p58 = scmp.eq.s32.totalorder %s16, 1
      %p59 = por %p57, %p58
      %p60 = scmp.ne.s32.totalorder %s52, %s55
      %p61 = scmp.eq.s32.totalorder %s16, 0
      %p62 = por %p60, %p61
      %p63 = scmp.ne.s32.totalorder %s52, %s55
      %p64 = scmp.eq.s32.totalorder %s21, 1
      %p65 = por %p63, %p64
      %p66 = scmp.ne.s32.totalorder %s55, %s56
      %p67 = scmp.eq.s32.totalorder %s21, 0
      %p68 = por %p66, %p67
      %p69 = scmp.ne.s32.totalorder %s55, %s56
      %p70 = scmp.eq.s32.totalorder %s22, 1
      %p71 = por %p69, %p70
      %p73 = scmp.ne.s32.totalorder %s56, %s72
      %p74 = scmp.eq.s32.totalorder %s22, 0
      %p75 = por %p73, %p74
      %s76 = ssub.s32 %s16, %s23
      %p77 = scmp.eq.s32.totalorder %s76, 0
      %s79 = sadd.s32 %s78, 1
      %s80 = scalar_select %p77, %s78, %s79
      %p83 = pneg %p77
      %p84 = scmp.eq.s32.totalorder %s16, 1
      %p85 = por %p83, %p84
      %p86 = scmp.ne.s32.totalorder %s78, %s81
      %p87 = scmp.eq.s32.totalorder %s16, 0
      %p88 = por %p86, %p87
      %p89 = scmp.ne.s32.totalorder %s78, %s81
      %p90 = scmp.eq.s32.totalorder %s21, 1
      %p91 = por %p89, %p90
      %p92 = scmp.ne.s32.totalorder %s81, %s82
      %p93 = scmp.eq.s32.totalorder %s21, 0
      %p94 = por %p92, %p93
      %p95 = scmp.ne.s32.totalorder %s81, %s82
      %p96 = scmp.eq.s32.totalorder %s22, 1
      %p97 = por %p95, %p96
      %p99 = scmp.ne.s32.totalorder %s82, %s98
      %p100 = scmp.eq.s32.totalorder %s22, 0
      %p101 = por %p99, %p100
      %s102 = ssub.s32 %s16, %s23
      %p103 = scmp.eq.s32.totalorder %s102, 0
      %s105 = sadd.s32 %s104, 1
      %s106 = scalar_select %p103, %s104, %s105
      %p109 = pneg %p103
      %p110 = scmp.eq.s32.totalorder %s16, 1
      %p111 = por %p109, %p110
      %p112 = scmp.ne.s32.totalorder %s104, %s107
      %p113 = scmp.eq.s32.totalorder %s16, 0
      %p114 = por %p112, %p113
      %p115 = scmp.ne.s32.totalorder %s104, %s107
      %p116 = scmp.eq.s32.totalorder %s21, 1
      %p117 = por %p115, %p116
      %p118 = scmp.ne.s32.totalorder %s107, %s108
      %p119 = scmp.eq.s32.totalorder %s21, 0
      %p120 = por %p118, %p119
      %p121 = scmp.ne.s32.totalorder %s107, %s108
      %p122 = scmp.eq.s32.totalorder %s22, 1
      %p123 = por %p121, %p122
      %p125 = scmp.ne.s32.totalorder %s108, %s124
      %p126 = scmp.eq.s32.totalorder %s22, 0
      %p127 = por %p125, %p126
      %s129 = sadd.s32 %s128, 1
      %p132 = scmp.eq.s32.totalorder %s16, 1
      %p133 = scmp.ne.s32.totalorder %s128, %s130
      %p134 = scmp.eq.s32.totalorder %s16, 0
      %p135 = por %p133, %p134
      %p136 = scmp.ne.s32.totalorder %s128, %s130
      %p137 = scmp.eq.s32.totalorder %s21, 1
      %p138 = por %p136, %p137
      %p139 = scmp.ne.s32.totalorder %s130, %s131
      %p140 = scmp.eq.s32.totalorder %s21, 0
      %p141 = por %p139, %p140
      %p142 = scmp.ne.s32.totalorder %s130, %s131
      %p143 = scmp.eq.s32.totalorder %s22, 1
      %p144 = por %p142, %p143
      %p146 = scmp.ne.s32.totalorder %s131, %s145
      %p147 = scmp.eq.s32.totalorder %s22, 0
      %p148 = por %p146, %p147
      %s150 = sadd.s32 %s149, 1
      %p153 = scmp.eq.s32.totalorder %s16, 1
      %p154 = scmp.ne.s32.totalorder %s149, %s151
      %p155 = scmp.eq.s32.totalorder %s16, 0
      %p156 = por %p154, %p155
      %p157 = scmp.ne.s32.totalorder %s149, %s151
      %p158 = scmp.eq.s32.totalorder %s21, 1
      %p159 = por %p157, %p158
      %p160 = scmp.ne.s32.totalorder %s151, %s152
      %p161 = scmp.eq.s32.totalorder %s21, 0
      %p162 = por %p160, %p161
      %p163 = scmp.ne.s32.totalorder %s151, %s152
      %p164 = scmp.eq.s32.totalorder %s22, 1
      %p165 = por %p163, %p164
      %p167 = scmp.ne.s32.totalorder %s152, %s166
      %p168 = scmp.eq.s32.totalorder %s22, 0
      %p169 = por %p167, %p168
      %s171 = sadd.s32 %s170, 1
      %p174 = scmp.eq.s32.totalorder %s16, 1
      %p175 = scmp.ne.s32.totalorder %s170, %s172
      %p176 = scmp.eq.s32.totalorder %s16, 0
      %p177 = por %p175, %p176
      %p178 = scmp.ne.s32.totalorder %s170, %s172
      %p179 = scmp.eq.s32.totalorder %s21, 1
      %p180 = por %p178, %p179
      %p181 = scmp.ne.s32.totalorder %s172, %s173
      %p182 = scmp.eq.s32.totalorder %s21, 0
      %p183 = por %p181, %p182
      %p184 = scmp.ne.s32.totalorder %s172, %s173
      %p185 = scmp.eq.s32.totalorder %s22, 1
      %p186 = por %p184, %p185
      %p188 = scmp.ne.s32.totalorder %s173, %s187
      %p189 = scmp.eq.s32.totalorder %s22, 0
      %p190 = por %p188, %p189
      %s191 = ssub.s32 %s16, %s23
      %p192 = scmp.eq.s32.totalorder %s191, 0
      %s194 = sadd.s32 %s193, 1
      %s195 = scalar_select %p192, %s193, %s194
      %p198 = pneg %p192
      %p199 = scmp.eq.s32.totalorder %s16, 1
      %p200 = por %p198, %p199
      %p201 = scmp.ne.s32.totalorder %s193, %s196
      %p202 = scmp.eq.s32.totalorder %s16, 0
      %p203 = por %p201, %p202
      %p204 = scmp.ne.s32.totalorder %s193, %s196
      %p205 = scmp.eq.s32.totalorder %s21, 1
      %p206 = por %p204, %p205
      %p207 = scmp.ne.s32.totalorder %s196, %s197
      %p208 = scmp.eq.s32.totalorder %s21, 0
      %p209 = por %p207, %p208
      %p210 = scmp.ne.s32.totalorder %s196, %s197
      %p211 = scmp.eq.s32.totalorder %s22, 1
      %p212 = por %p210, %p211
      %p214 = scmp.ne.s32.totalorder %s197, %s213
      %p215 = scmp.eq.s32.totalorder %s22, 0
      %p216 = por %p214, %p215
      %p217 = scmp.le.s32.totalorder 1, %s16
      %p218 = scmp.lt.s32.totalorder %s16, 3
      %p219 = pnand %p217, %p218
      %p220 = pneg %p219
      // Predicated region
      $region9: #{tpu_custom_call.1} parent=5 // pred_check
        _
      $region10: #{tpu_custom_call.1} parent=5 // pred_check_branch
        %222 = sbr.rel (%p219) target = $region12
      $region11: #{tpu_custom_call.1} parent=5 // pred_region
        %s223 = ssub.s32 %s16, 1
        // Predicated region
        $region13: #{tpu_custom_call.1} parent=11 // pred_check
          %p224 = pneg %p141
        $region14: #{tpu_custom_call.1} parent=11 // pred_check_branch
          %226 = sbr.rel (%p224) target = $region16
        $region15: #{tpu_custom_call.1} parent=11 // pred_region
          _
        $region16: #{tpu_custom_call.1} parent=11 // pred_fallthru
          _
        // Predicated region
        $region17: #{tpu_custom_call.1} parent=11 // pred_check
          %p227 = pneg %p162
        $region18: #{tpu_custom_call.1} parent=11 // pred_check_branch
          %229 = sbr.rel (%p227) target = $region20
        $region19: #{tpu_custom_call.1} parent=11 // pred_region
          _
        $region20: #{tpu_custom_call.1} parent=11 // pred_fallthru
          _
        // Predicated region
        $region21: #{tpu_custom_call.1} parent=11 // pred_check
          %p230 = pneg %p183
        $region22: #{tpu_custom_call.1} parent=11 // pred_check_branch
          %232 = sbr.rel (%p230) target = $region24
        $region23: #{tpu_custom_call.1} parent=11 // pred_region
          _
        $region24: #{tpu_custom_call.1} parent=11 // pred_fallthru
          _
      $region12: #{tpu_custom_call.1} parent=5 // pred_fallthru
        _
      %p233 = scmp.lt.s32.totalorder %s16, 2
      // Predicated region
      $region25: #{tpu_custom_call.1} parent=5 // pred_check
        %p234 = pneg %p233
      $region26: #{tpu_custom_call.1} parent=5 // pred_check_branch
        %236 = sbr.rel (%p234) target = $region28
      $region27: #{tpu_custom_call.1} parent=5 // pred_region
        // Predicated region
        $region29: #{tpu_custom_call.1} parent=27 // pred_check
          %p237 = pneg %p36
        $region30: #{tpu_custom_call.1} parent=27 // pred_check_branch
          %239 = sbr.rel (%p237) target = $region32
        $region31: #{tpu_custom_call.1} parent=27 // pred_region
          %s240 = smul.u32 8, %s16
          %p241 = scmp.lt.s32.totalorder %s240, 15
          %s242 = scalar_select %p241, %s240, 15
          %s243 = smul.addr %s242, 4
          %s244 = scalar_lea.vmem %s0, %s243
          %s245 = smul.u32 8, %s16
        $region32: #{tpu_custom_call.1} parent=27 // pred_fallthru
          _
        // Predicated region
        $region33: #{tpu_custom_call.1} parent=27 // pred_check
          %p246 = pneg %p62
        $region34: #{tpu_custom_call.1} parent=27 // pred_check_branch
          %248 = sbr.rel (%p246) target = $region36
        $region35: #{tpu_custom_call.1} parent=27 // pred_region
          %s249 = smul.u32 8, %s16
          %p250 = scmp.lt.s32.totalorder %s249, 15
          %s251 = scalar_select %p250, %s249, 15
          %s252 = smul.addr %s251, 2
          %s253 = smul.addr %s252, 4
          %s254 = scalar_lea.vmem %s1, %s253
          %s255 = smul.u32 8, %s16
        $region36: #{tpu_custom_call.1} parent=27 // pred_fallthru
          _
        // Predicated region
        $region37: #{tpu_custom_call.1} parent=27 // pred_check
          %p256 = pneg %p88
        $region38: #{tpu_custom_call.1} parent=27 // pred_check_branch
          %258 = sbr.rel (%p256) target = $region40
        $region39: #{tpu_custom_call.1} parent=27 // pred_region
          %s259 = smul.u32 8, %s16
          %p260 = scmp.lt.s32.totalorder %s259, 15
          %s261 = scalar_select %p260, %s259, 15
          %s262 = smul.addr %s261, 4
          %s263 = scalar_lea.vmem %s2, %s262
          %s264 = smul.u32 8, %s16
        $region40: #{tpu_custom_call.1} parent=27 // pred_fallthru
          _
        // Predicated region
        $region41: #{tpu_custom_call.1} parent=27 // pred_check
          %p265 = pneg %p114
        $region42: #{tpu_custom_call.1} parent=27 // pred_check_branch
          %267 = sbr.rel (%p265) target = $region44
        $region43: #{tpu_custom_call.1} parent=27 // pred_region
          %s268 = smul.u32 8, %s16
          %p269 = scmp.lt.s32.totalorder %s268, 15
          %s270 = scalar_select %p269, %s268, 15
          %s271 = smul.addr %s270, 2
          %s272 = smul.addr %s271, 4
          %s273 = scalar_lea.vmem %s3, %s272
          %s274 = smul.u32 8, %s16
        $region44: #{tpu_custom_call.1} parent=27 // pred_fallthru
          _
      $region28: #{tpu_custom_call.1} parent=5 // pred_fallthru
        _
      %p275 = scmp.le.s32.totalorder 1, %s16
      %p276 = scmp.lt.s32.totalorder %s16, 3
      %p277 = pnand %p275, %p276
      %p278 = pneg %p277
      // Predicated region
      $region45: #{tpu_custom_call.1} parent=5 // pred_check
        _
      $region46: #{tpu_custom_call.1} parent=5 // pred_check_branch
        %280 = sbr.rel (%p277) target = $region48
      $region47: #{tpu_custom_call.1} parent=5 // pred_region
        %s281 = ssub.s32 %s16, 1
        %s282 = smul.u32 8, %s21
        %p283 = scmp.lt.s32.totalorder %s282, 15
        %s284 = scalar_select %p283, %s282, 15
        %s285 = smul.addr %s284, 4
        %s286 = scalar_lea.vmem %s0, %s285
        %p287 = pneg %p42
        %p288 = pneg %p39
        %s289 = smul.u32 8, %s21
        %p290 = scmp.lt.s32.totalorder %s289, 15
        %s291 = scalar_select %p290, %s289, 15
        %s292 = smul.addr %s291, 2
        %s293 = smul.addr %s292, 4
        %s294 = scalar_lea.vmem %s1, %s293
        %p295 = pneg %p68
        %p296 = pneg %p65
        %s297 = smul.u32 8, %s21
        %p298 = scmp.lt.s32.totalorder %s297, 15
        %s299 = scalar_select %p298, %s297, 15
        %s300 = smul.addr %s299, 4
        %s301 = scalar_lea.vmem %s2, %s300
        %p302 = pneg %p94
        %p303 = pneg %p91
        %s304 = smul.u32 8, %s21
        %p305 = scmp.lt.s32.totalorder %s304, 15
        %s306 = scalar_select %p305, %s304, 15
        %s307 = smul.addr %s306, 2
        %s308 = smul.addr %s307, 4
        %s309 = scalar_lea.vmem %s3, %s308
        %p310 = pneg %p120
        %p311 = pneg %p117
        %p312 = pneg %p141
        %p313 = pneg %p138
        %p314 = pneg %p162
        %p315 = pneg %p159
        %p316 = pneg %p183
        %p317 = pneg %p180
        %p318 = pneg %p209
        %p319 = pneg %p206
        %s320 = sand.u32 %s196, 1
        %s321 = scalar_lea.sflag [#allocation3], %s320
        %s322 = sand.u32 %s196, 1
        %s323 = smul.addr %s322, 8
        %s324 = scalar_lea.vmem [#allocation2], %s323
        %s325 = smul.u32 8, %s21
        %p326 = scmp.lt.s32.totalorder %s325, 15
        %s327 = scalar_select %p326, %s325, 15
        %s328 = smul.addr %s327, 4
        %s329 = scalar_lea.vmem %s0, %s328
        %s330 = smul.u32 8, %s21
        %s331 = smul.u32 8, %s21
        %p332 = scmp.lt.s32.totalorder %s331, 15
        %s333 = scalar_select %p332, %s331, 15
        %s334 = smul.addr %s333, 2
        %s335 = smul.addr %s334, 4
        %s336 = scalar_lea.vmem %s1, %s335
        %s337 = smul.u32 8, %s21
        %s338 = smul.u32 8, %s21
        %p339 = scmp.lt.s32.totalorder %s338, 15
        %s340 = scalar_select %p339, %s338, 15
        %s341 = smul.addr %s340, 4
        %s342 = scalar_lea.vmem %s2, %s341
        %s343 = smul.u32 8, %s21
        %s344 = smul.u32 8, %s21
        %p345 = scmp.lt.s32.totalorder %s344, 15
        %s346 = scalar_select %p345, %s344, 15
        %s347 = smul.addr %s346, 2
        %s348 = smul.addr %s347, 4
        %s349 = scalar_lea.vmem %s3, %s348
        %s350 = smul.u32 8, %s21
        %v352 = vld [vmem:[%s329] sm:$0xf]
        %v353 = vld [vmem:[%s329 + $0x4] sm:$0xf]
        %v354 = vld [vmem:[%s329 + $0x8] sm:$0xf]
        %v355 = vld [vmem:[%s329 + $0xc] sm:$0xf]
        %v356 = vld [vmem:[%s329 + $0x10] sm:$0xf]
        %v357 = vld [vmem:[%s329 + $0x14] sm:$0xf]
        %v358 = vld [vmem:[%s329 + $0x18] sm:$0xf]
        %v359 = vld [vmem:[%s329 + $0x1c] sm:$0xf]
        %v360 = vld [vmem:[%s336] sm:$0xf]
        %v361 = vld [vmem:[%s336 + $0x4] sm:$0x3]
        %v362 = vld [vmem:[%s336 + $0x8] sm:$0xf]
        %v363 = vld [vmem:[%s336 + $0xc] sm:$0x3]
        %v364 = vld [vmem:[%s336 + $0x10] sm:$0xf]
        %v365 = vld [vmem:[%s336 + $0x14] sm:$0x3]
        %v366 = vld [vmem:[%s336 + $0x18] sm:$0xf]
        %v367 = vld [vmem:[%s336 + $0x1c] sm:$0x3]
        %v368 = vld [vmem:[%s336 + $0x20] sm:$0xf]
        %v369 = vld [vmem:[%s336 + $0x24] sm:$0x3]
        %v370 = vld [vmem:[%s336 + $0x28] sm:$0xf]
        %v371 = vld [vmem:[%s336 + $0x2c] sm:$0x3]
        %v372 = vld [vmem:[%s336 + $0x30] sm:$0xf]
        %v373 = vld [vmem:[%s336 + $0x34] sm:$0x3]
        %v374 = vld [vmem:[%s336 + $0x38] sm:$0xf]
        %v375 = vld [vmem:[%s336 + $0x3c] sm:$0x3]
        %v376 = vld [vmem:[%s342] sm:$0xf]
        %v377 = vld [vmem:[%s342 + $0x4] sm:$0xf]
        %v378 = vld [vmem:[%s342 + $0x8] sm:$0xf]
        %v379 = vld [vmem:[%s342 + $0xc] sm:$0xf]
        %v380 = vld [vmem:[%s342 + $0x10] sm:$0xf]
        %v381 = vld [vmem:[%s342 + $0x14] sm:$0xf]
        %v382 = vld [vmem:[%s342 + $0x18] sm:$0xf]
        %v383 = vld [vmem:[%s342 + $0x1c] sm:$0xf]
        %v384 = vld [vmem:[%s349] sm:$0xf]
        %v385 = vld [vmem:[%s349 + $0x4] sm:$0x1]
        %v386 = vld [vmem:[%s349 + $0x8] sm:$0xf]
        %v387 = vld [vmem:[%s349 + $0xc] sm:$0x1]
        %v388 = vld [vmem:[%s349 + $0x10] sm:$0xf]
        %v389 = vld [vmem:[%s349 + $0x14] sm:$0x1]
        %v390 = vld [vmem:[%s349 + $0x18] sm:$0xf]
        %v391 = vld [vmem:[%s349 + $0x1c] sm:$0x1]
        %v392 = vld [vmem:[%s349 + $0x20] sm:$0xf]
        %v393 = vld [vmem:[%s349 + $0x24] sm:$0x1]
        %v394 = vld [vmem:[%s349 + $0x28] sm:$0xf]
        %v395 = vld [vmem:[%s349 + $0x2c] sm:$0x1]
        %v396 = vld [vmem:[%s349 + $0x30] sm:$0xf]
        %v397 = vld [vmem:[%s349 + $0x34] sm:$0x1]
        %v398 = vld [vmem:[%s349 + $0x38] sm:$0xf]
        %v399 = vld [vmem:[%s349 + $0x3c] sm:$0x1]
        %v400 = vld [vmem:[%s4] sm:$0xf]
        %v401 = vld [vmem:[%s4 + $0x4] sm:$0xf]
        %v402 = vld [vmem:[%s5] sm:$0x1]
        %v403 = vld [vmem:[%s6] sm:$0x1]
        %v406 = vunpack.c.l.b16 %v360
        %v407 = vunpack.c.l.b16 %v361
        %v408 = vpack.c.b16 %v407, %v406
        %vm409 = vcmask 97280
        %v411 = vsel %vm409, %v352, 0
        %vm413 = vcmask 1045504
        %v415 = vsel %vm413, %v408, 0
        %417 = vmatprep.subr.bf16.mxu0 0
        %418 = vmatpush1.bf16.msra.mxu0 %v415
        %419 = vmatprep.subr.bf16.mxu0 0
        %420 = vmatpush1.bf16.msra.mxu0 0
        %421 = vmatprep.subr.bf16.mxu0 0
        %422 = vmatpush1.bf16.msra.mxu0 0
        %423 = vmatprep.subr.bf16.mxu0 0
        %424 = vmatpush1.bf16.msra.mxu0 0
        %425 = vmatprep.subr.bf16.mxu0 0
        %426 = vmatpush1.bf16.msra.mxu0 0
        %427 = vmatprep.subr.bf16.mxu0 0
        %428 = vmatpush1.bf16.msra.mxu0 0
        %429 = vmatprep.subr.bf16.mxu0 0
        %430 = vmatpush1.bf16.msra.mxu0 0
        %431 = vmatprep.subr.bf16.mxu0 0
        %432 = vmatpush1.bf16.msra.mxu0 0
        %433 = vmatprep.subr.bf16.mxu0 0
        %434 = vmatpush1.bf16.msra.mxu0 0
        %435 = vmatprep.subr.bf16.mxu0 0
        %436 = vmatpush1.bf16.msra.mxu0 0
        %437 = vmatprep.subr.bf16.mxu0 0
        %438 = vmatpush1.bf16.msra.mxu0 0
        %439 = vmatprep.subr.bf16.mxu0 0
        %440 = vmatpush1.bf16.msra.mxu0 0
        %441 = vmatprep.subr.bf16.mxu0 0
        %442 = vmatpush1.bf16.msra.mxu0 0
        %443 = vmatprep.subr.bf16.mxu0 0
        %444 = vmatpush1.bf16.msra.mxu0 0
        %445 = vmatprep.subr.bf16.mxu0 0
        %446 = vmatpush1.bf16.msra.mxu0 0
        %447 = vmatprep.subr.bf16.mxu0 0
        %448 = vmatpush1.bf16.msra.mxu0 0
        %449 = vmatprep.mubr.bf16.mxu0 0
        %450 = vmatmul.mubr.bf16.gmra.mrb[0].mxu0 %v411
        %v451 = vpop.f32.mrb[0].mxu0
        %v452 = vadd.f32 0.0, %v451
        %v453 = vpop.f32.mrb[0].mxu0
        %v454 = vpop.f32.mrb[0].mxu0
        %v455 = vpop.f32.mrb[0].mxu0
        %456 = vdwg.mxu0
        %v459 = vunpack.c.l.b16 %v362
        %v460 = vunpack.c.l.b16 %v363
        %v461 = vpack.c.b16 %v460, %v459
        %v463 = vsel %vm409, %v353, 0
        %v466 = vsel %vm413, %v461, 0
        %468 = vmatprep.subr.bf16.mxu0 0
        %469 = vmatpush1.bf16.msra.mxu0 %v466
        %470 = vmatprep.subr.bf16.mxu0 0
        %471 = vmatpush1.bf16.msra.mxu0 0
        %472 = vmatprep.subr.bf16.mxu0 0
        %473 = vmatpush1.bf16.msra.mxu0 0
        %474 = vmatprep.subr.bf16.mxu0 0
        %475 = vmatpush1.bf16.msra.mxu0 0
        %476 = vmatprep.subr.bf16.mxu0 0
        %477 = vmatpush1.bf16.msra.mxu0 0
        %478 = vmatprep.subr.bf16.mxu0 0
        %479 = vmatpush1.bf16.msra.mxu0 0
        %480 = vmatprep.subr.bf16.mxu0 0
        %481 = vmatpush1.bf16.msra.mxu0 0
        %482 = vmatprep.subr.bf16.mxu0 0
        %483 = vmatpush1.bf16.msra.mxu0 0
        %484 = vmatprep.subr.bf16.mxu0 0
        %485 = vmatpush1.bf16.msra.mxu0 0
        %486 = vmatprep.subr.bf16.mxu0 0
        %487 = vmatpush1.bf16.msra.mxu0 0
        %488 = vmatprep.subr.bf16.mxu0 0
        %489 = vmatpush1.bf16.msra.mxu0 0
        %490 = vmatprep.subr.bf16.mxu0 0
        %491 = vmatpush1.bf16.msra.mxu0 0
        %492 = vmatprep.subr.bf16.mxu0 0
        %493 = vmatpush1.bf16.msra.mxu0 0
        %494 = vmatprep.subr.bf16.mxu0 0
        %495 = vmatpush1.bf16.msra.mxu0 0
        %496 = vmatprep.subr.bf16.mxu0 0
        %497 = vmatpush1.bf16.msra.mxu0 0
        %498 = vmatprep.subr.bf16.mxu0 0
        %499 = vmatpush1.bf16.msra.mxu0 0
        %500 = vmatprep.mubr.bf16.mxu0 0
        %501 = vmatmul.mubr.bf16.gmra.mrb[0].mxu0 %v463
        %v502 = vpop.f32.mrb[0].mxu0
        %v503 = vadd.f32 0.0, %v502
        %v504 = vpop.f32.mrb[0].mxu0
        %v505 = vpop.f32.mrb[0].mxu0
        %v506 = vpop.f32.mrb[0].mxu0
        %507 = vdwg.mxu0
        %v510 = vunpack.c.l.b16 %v364
        %v511 = vunpack.c.l.b16 %v365
        %v512 = vpack.c.b16 %v511, %v510
        %v514 = vsel %vm409, %v354, 0
        %v517 = vsel %vm413, %v512, 0
        %519 = vmatprep.subr.bf16.mxu0 0
        %520 = vmatpush1.bf16.msra.mxu0 %v517
        %521 = vmatprep.subr.bf16.mxu0 0
        %522 = vmatpush1.bf16.msra.mxu0 0
        %523 = vmatprep.subr.bf16.mxu0 0
        %524 = vmatpush1.bf16.msra.mxu0 0
        %525 = vmatprep.subr.bf16.mxu0 0
        %526 = vmatpush1.bf16.msra.mxu0 0
        %527 = vmatprep.subr.bf16.mxu0 0
        %528 = vmatpush1.bf16.msra.mxu0 0
        %529 = vmatprep.subr.bf16.mxu0 0
        %530 = vmatpush1.bf16.msra.mxu0 0
        %531 = vmatprep.subr.bf16.mxu0 0
        %532 = vmatpush1.bf16.msra.mxu0 0
        %533 = vmatprep.subr.bf16.mxu0 0
        %534 = vmatpush1.bf16.msra.mxu0 0
        %535 = vmatprep.subr.bf16.mxu0 0
        %536 = vmatpush1.bf16.msra.mxu0 0
        %537 = vmatprep.subr.bf16.mxu0 0
        %538 = vmatpush1.bf16.msra.mxu0 0
        %539 = vmatprep.subr.bf16.mxu0 0
        %540 = vmatpush1.bf16.msra.mxu0 0
        %541 = vmatprep.subr.bf16.mxu0 0
        %542 = vmatpush1.bf16.msra.mxu0 0
        %543 = vmatprep.subr.bf16.mxu0 0
        %544 = vmatpush1.bf16.msra.mxu0 0
        %545 = vmatprep.subr.bf16.mxu0 0
        %546 = vmatpush1.bf16.msra.mxu0 0
        %547 = vmatprep.subr.bf16.mxu0 0
        %548 = vmatpush1.bf16.msra.mxu0 0
        %549 = vmatprep.subr.bf16.mxu0 0
        %550 = vmatpush1.bf16.msra.mxu0 0
        %551 = vmatprep.mubr.bf16.mxu0 0
        %552 = vmatmul.mubr.bf16.gmra.mrb[0].mxu0 %v514
        %v553 = vpop.f32.mrb[0].mxu0
        %v554 = vadd.f32 0.0, %v553
        %v555 = vpop.f32.mrb[0].mxu0
        %v556 = vpop.f32.mrb[0].mxu0
        %v557 = vpop.f32.mrb[0].mxu0
        %558 = vdwg.mxu0
        %v561 = vunpack.c.l.b16 %v366
        %v562 = vunpack.c.l.b16 %v367
        %v563 = vpack.c.b16 %v562, %v561
        %v565 = vsel %vm409, %v355, 0
        %v568 = vsel %vm413, %v563, 0
        %570 = vmatprep.subr.bf16.mxu0 0
        %571 = vmatpush1.bf16.msra.mxu0 %v568
        %572 = vmatprep.subr.bf16.mxu0 0
        %573 = vmatpush1.bf16.msra.mxu0 0
        %574 = vmatprep.subr.bf16.mxu0 0
        %575 = vmatpush1.bf16.msra.mxu0 0
        %576 = vmatprep.subr.bf16.mxu0 0
        %577 = vmatpush1.bf16.msra.mxu0 0
        %578 = vmatprep.subr.bf16.mxu0 0
        %579 = vmatpush1.bf16.msra.mxu0 0
        %580 = vmatprep.subr.bf16.mxu0 0
        %581 = vmatpush1.bf16.msra.mxu0 0
        %582 = vmatprep.subr.bf16.mxu0 0
        %583 = vmatpush1.bf16.msra.mxu0 0
        %584 = vmatprep.subr.bf16.mxu0 0
        %585 = vmatpush1.bf16.msra.mxu0 0
        %586 = vmatprep.subr.bf16.mxu0 0
        %587 = vmatpush1.bf16.msra.mxu0 0
        %588 = vmatprep.subr.bf16.mxu0 0
        %589 = vmatpush1.bf16.msra.mxu0 0
        %590 = vmatprep.subr.bf16.mxu0 0
        %591 = vmatpush1.bf16.msra.mxu0 0
        %592 = vmatprep.subr.bf16.mxu0 0
        %593 = vmatpush1.bf16.msra.mxu0 0
        %594 = vmatprep.subr.bf16.mxu0 0
        %595 = vmatpush1.bf16.msra.mxu0 0
        %596 = vmatprep.subr.bf16.mxu0 0
        %597 = vmatpush1.bf16.msra.mxu0 0
        %598 = vmatprep.subr.bf16.mxu0 0
        %599 = vmatpush1.bf16.msra.mxu0 0
        %600 = vmatprep.subr.bf16.mxu0 0
        %601 = vmatpush1.bf16.msra.mxu0 0
        %602 = vmatprep.mubr.bf16.mxu0 0
        %603 = vmatmul.mubr.bf16.gmra.mrb[0].mxu0 %v565
        %v604 = vpop.f32.mrb[0].mxu0
        %v605 = vadd.f32 0.0, %v604
        %v606 = vpop.f32.mrb[0].mxu0
        %v607 = vpop.f32.mrb[0].mxu0
        %v608 = vpop.f32.mrb[0].mxu0
        %609 = vdwg.mxu0
        %v612 = vunpack.c.l.b16 %v368
        %v613 = vunpack.c.l.b16 %v369
        %v614 = vpack.c.b16 %v613, %v612
        %v616 = vsel %vm409, %v356, 0
        %v619 = vsel %vm413, %v614, 0
        %621 = vmatprep.subr.bf16.mxu0 0
        %622 = vmatpush1.bf16.msra.mxu0 %v619
        %623 = vmatprep.subr.bf16.mxu0 0
        %624 = vmatpush1.bf16.msra.mxu0 0
        %625 = vmatprep.subr.bf16.mxu0 0
        %626 = vmatpush1.bf16.msra.mxu0 0
        %627 = vmatprep.subr.bf16.mxu0 0
        %628 = vmatpush1.bf16.msra.mxu0 0
        %629 = vmatprep.subr.bf16.mxu0 0
        %630 = vmatpush1.bf16.msra.mxu0 0
        %631 = vmatprep.subr.bf16.mxu0 0
        %632 = vmatpush1.bf16.msra.mxu0 0
        %633 = vmatprep.subr.bf16.mxu0 0
        %634 = vmatpush1.bf16.msra.mxu0 0
        %635 = vmatprep.subr.bf16.mxu0 0
        %636 = vmatpush1.bf16.msra.mxu0 0
        %637 = vmatprep.subr.bf16.mxu0 0
        %638 = vmatpush1.bf16.msra.mxu0 0
        %639 = vmatprep.subr.bf16.mxu0 0
        %640 = vmatpush1.bf16.msra.mxu0 0
        %641 = vmatprep.subr.bf16.mxu0 0
        %642 = vmatpush1.bf16.msra.mxu0 0
        %643 = vmatprep.subr.bf16.mxu0 0
        %644 = vmatpush1.bf16.msra.mxu0 0
        %645 = vmatprep.subr.bf16.mxu0 0
        %646 = vmatpush1.bf16.msra.mxu0 0
        %647 = vmatprep.subr.bf16.mxu0 0
        %648 = vmatpush1.bf16.msra.mxu0 0
        %649 = vmatprep.subr.bf16.mxu0 0
        %650 = vmatpush1.bf16.msra.mxu0 0
        %651 = vmatprep.subr.bf16.mxu0 0
        %652 = vmatpush1.bf16.msra.mxu0 0
        %653 = vmatprep.mubr.bf16.mxu0 0
        %654 = vmatmul.mubr.bf16.gmra.mrb[0].mxu0 %v616
        %v655 = vpop.f32.mrb[0].mxu0
        %v656 = vadd.f32 0.0, %v655
        %v657 = vpop.f32.mrb[0].mxu0
        %v658 = vpop.f32.mrb[0].mxu0
        %v659 = vpop.f32.mrb[0].mxu0
        %660 = vdwg.mxu0
        %v663 = vunpack.c.l.b16 %v370
        %v664 = vunpack.c.l.b16 %v371
        %v665 = vpack.c.b16 %v664, %v663
        %v667 = vsel %vm409, %v357, 0
        %v670 = vsel %vm413, %v665, 0
        %672 = vmatprep.subr.bf16.mxu0 0
        %673 = vmatpush1.bf16.msra.mxu0 %v670
        %674 = vmatprep.subr.bf16.mxu0 0
        %675 = vmatpush1.bf16.msra.mxu0 0
        %676 = vmatprep.subr.bf16.mxu0 0
        %677 = vmatpush1.bf16.msra.mxu0 0
        %678 = vmatprep.subr.bf16.mxu0 0
        %679 = vmatpush1.bf16.msra.mxu0 0
        %680 = vmatprep.subr.bf16.mxu0 0
        %681 = vmatpush1.bf16.msra.mxu0 0
        %682 = vmatprep.subr.bf16.mxu0 0
        %683 = vmatpush1.bf16.msra.mxu0 0
        %684 = vmatprep.subr.bf16.mxu0 0
        %685 = vmatpush1.bf16.msra.mxu0 0
        %686 = vmatprep.subr.bf16.mxu0 0
        %687 = vmatpush1.bf16.msra.mxu0 0
        %688 = vmatprep.subr.bf16.mxu0 0
        %689 = vmatpush1.bf16.msra.mxu0 0
        %690 = vmatprep.subr.bf16.mxu0 0
        %691 = vmatpush1.bf16.msra.mxu0 0
        %692 = vmatprep.subr.bf16.mxu0 0
        %693 = vmatpush1.bf16.msra.mxu0 0
        %694 = vmatprep.subr.bf16.mxu0 0
        %695 = vmatpush1.bf16.msra.mxu0 0
        %696 = vmatprep.subr.bf16.mxu0 0
        %697 = vmatpush1.bf16.msra.mxu0 0
        %698 = vmatprep.subr.bf16.mxu0 0
        %699 = vmatpush1.bf16.msra.mxu0 0
        %700 = vmatprep.subr.bf16.mxu0 0
        %701 = vmatpush1.bf16.msra.mxu0 0
        %702 = vmatprep.subr.bf16.mxu0 0
        %703 = vmatpush1.bf16.msra.mxu0 0
        %704 = vmatprep.mubr.bf16.mxu0 0
        %705 = vmatmul.mubr.bf16.gmra.mrb[0].mxu0 %v667
        %v706 = vpop.f32.mrb[0].mxu0
        %v707 = vadd.f32 0.0, %v706
        %v708 = vpop.f32.mrb[0].mxu0
        %v709 = vpop.f32.mrb[0].mxu0
        %v710 = vpop.f32.mrb[0].mxu0
        %711 = vdwg.mxu0
        %v714 = vunpack.c.l.b16 %v372
        %v715 = vunpack.c.l.b16 %v373
        %v716 = vpack.c.b16 %v715, %v714
        %v718 = vsel %vm409, %v358, 0
        %v721 = vsel %vm413, %v716, 0
        %723 = vmatprep.subr.bf16.mxu0 0
        %724 = vmatpush1.bf16.msra.mxu0 %v721
        %725 = vmatprep.subr.bf16.mxu0 0
        %726 = vmatpush1.bf16.msra.mxu0 0
        %727 = vmatprep.subr.bf16.mxu0 0
        %728 = vmatpush1.bf16.msra.mxu0 0
        %729 = vmatprep.subr.bf16.mxu0 0
        %730 = vmatpush1.bf16.msra.mxu0 0
        %731 = vmatprep.subr.bf16.mxu0 0
        %732 = vmatpush1.bf16.msra.mxu0 0
        %733 = vmatprep.subr.bf16.mxu0 0
        %734 = vmatpush1.bf16.msra.mxu0 0
        %735 = vmatprep.subr.bf16.mxu0 0
        %736 = vmatpush1.bf16.msra.mxu0 0
        %737 = vmatprep.subr.bf16.mxu0 0
        %738 = vmatpush1.bf16.msra.mxu0 0
        %739 = vmatprep.subr.bf16.mxu0 0
        %740 = vmatpush1.bf16.msra.mxu0 0
        %741 = vmatprep.subr.bf16.mxu0 0
        %742 = vmatpush1.bf16.msra.mxu0 0
        %743 = vmatprep.subr.bf16.mxu0 0
        %744 = vmatpush1.bf16.msra.mxu0 0
        %745 = vmatprep.subr.bf16.mxu0 0
        %746 = vmatpush1.bf16.msra.mxu0 0
        %747 = vmatprep.subr.bf16.mxu0 0
        %748 = vmatpush1.bf16.msra.mxu0 0
        %749 = vmatprep.subr.bf16.mxu0 0
        %750 = vmatpush1.bf16.msra.mxu0 0
        %751 = vmatprep.subr.bf16.mxu0 0
        %752 = vmatpush1.bf16.msra.mxu0 0
        %753 = vmatprep.subr.bf16.mxu0 0
        %754 = vmatpush1.bf16.msra.mxu0 0
        %755 = vmatprep.mubr.bf16.mxu0 0
        %756 = vmatmul.mubr.bf16.gmra.mrb[0].mxu0 %v718
        %v757 = vpop.f32.mrb[0].mxu0
        %v758 = vadd.f32 0.0, %v757
        %v759 = vpop.f32.mrb[0].mxu0
        %v760 = vpop.f32.mrb[0].mxu0
        %v761 = vpop.f32.mrb[0].mxu0
        %762 = vdwg.mxu0
        %v765 = vunpack.c.l.b16 %v374
        %v766 = vunpack.c.l.b16 %v375
        %v767 = vpack.c.b16 %v766, %v765
        %v769 = vsel %vm409, %v359, 0
        %v772 = vsel %vm413, %v767, 0
        %774 = vmatprep.subr.bf16.mxu0 0
        %775 = vmatpush1.bf16.msra.mxu0 %v772
        %776 = vmatprep.subr.bf16.mxu0 0
        %777 = vmatpush1.bf16.msra.mxu0 0
        %778 = vmatprep.subr.bf16.mxu0 0
        %779 = vmatpush1.bf16.msra.mxu0 0
        %780 = vmatprep.subr.bf16.mxu0 0
        %781 = vmatpush1.bf16.msra.mxu0 0
        %782 = vmatprep.subr.bf16.mxu0 0
        %783 = vmatpush1.bf16.msra.mxu0 0
        %784 = vmatprep.subr.bf16.mxu0 0
        %785 = vmatpush1.bf16.msra.mxu0 0
        %786 = vmatprep.subr.bf16.mxu0 0
        %787 = vmatpush1.bf16.msra.mxu0 0
        %788 = vmatprep.subr.bf16.mxu0 0
        %789 = vmatpush1.bf16.msra.mxu0 0
        %790 = vmatprep.subr.bf16.mxu0 0
        %791 = vmatpush1.bf16.msra.mxu0 0
        %792 = vmatprep.subr.bf16.mxu0 0
        %793 = vmatpush1.bf16.msra.mxu0 0
        %794 = vmatprep.subr.bf16.mxu0 0
        %795 = vmatpush1.bf16.msra.mxu0 0
        %796 = vmatprep.subr.bf16.mxu0 0
        %797 = vmatpush1.bf16.msra.mxu0 0
        %798 = vmatprep.subr.bf16.mxu0 0
        %799 = vmatpush1.bf16.msra.mxu0 0
        %800 = vmatprep.subr.bf16.mxu0 0
        %801 = vmatpush1.bf16.msra.mxu0 0
        %802 = vmatprep.subr.bf16.mxu0 0
        %803 = vmatpush1.bf16.msra.mxu0 0
        %804 = vmatprep.subr.bf16.mxu0 0
        %805 = vmatpush1.bf16.msra.mxu0 0
        %806 = vmatprep.mubr.bf16.mxu0 0
        %807 = vmatmul.mubr.bf16.gmra.mrb[0].mxu0 %v769
        %v808 = vpop.f32.mrb[0].mxu0
        %v809 = vadd.f32 0.0, %v808
        %v810 = vpop.f32.mrb[0].mxu0
        %v811 = vpop.f32.mrb[0].mxu0
        %v812 = vpop.f32.mrb[0].mxu0
        %813 = vdwg.mxu0
        %v816 = vunpack.c.l.b16 %v384
        %v817 = vunpack.c.l.b16 %v385
        %v818 = vpack.c.b16 %v817, %v816
        %vm819 = vcmask 80896
        %v821 = vsel %vm819, %v376, 0
        %vm823 = vcmask 1044480
        %v825 = vsel %vm823, %v818, 0
        %827 = vmatprep.subr.bf16.mxu0 0
        %828 = vmatpush1.bf16.msra.mxu0 %v825
        %829 = vmatprep.subr.bf16.mxu0 0
        %830 = vmatpush1.bf16.msra.mxu0 0
        %831 = vmatprep.subr.bf16.mxu0 0
        %832 = vmatpush1.bf16.msra.mxu0 0
        %833 = vmatprep.subr.bf16.mxu0 0
        %834 = vmatpush1.bf16.msra.mxu0 0
        %835 = vmatprep.subr.bf16.mxu0 0
        %836 = vmatpush1.bf16.msra.mxu0 0
        %837 = vmatprep.subr.bf16.mxu0 0
        %838 = vmatpush1.bf16.msra.mxu0 0
        %839 = vmatprep.subr.bf16.mxu0 0
        %840 = vmatpush1.bf16.msra.mxu0 0
        %841 = vmatprep.subr.bf16.mxu0 0
        %842 = vmatpush1.bf16.msra.mxu0 0
        %843 = vmatprep.subr.bf16.mxu0 0
        %844 = vmatpush1.bf16.msra.mxu0 0
        %845 = vmatprep.subr.bf16.mxu0 0
        %846 = vmatpush1.bf16.msra.mxu0 0
        %847 = vmatprep.subr.bf16.mxu0 0
        %848 = vmatpush1.bf16.msra.mxu0 0
        %849 = vmatprep.subr.bf16.mxu0 0
        %850 = vmatpush1.bf16.msra.mxu0 0
        %851 = vmatprep.subr.bf16.mxu0 0
        %852 = vmatpush1.bf16.msra.mxu0 0
        %853 = vmatprep.subr.bf16.mxu0 0
        %854 = vmatpush1.bf16.msra.mxu0 0
        %855 = vmatprep.subr.bf16.mxu0 0
        %856 = vmatpush1.bf16.msra.mxu0 0
        %857 = vmatprep.subr.bf16.mxu0 0
        %858 = vmatpush1.bf16.msra.mxu0 0
        %859 = vmatprep.mubr.bf16.mxu0 0
        %860 = vmatmul.mubr.bf16.gmra.mrb[0].mxu0 %v821
        %v861 = vpop.f32.mrb[0].mxu0
        %v862 = vadd.f32 0.0, %v861
        %v863 = vpop.f32.mrb[0].mxu0
        %v864 = vpop.f32.mrb[0].mxu0
        %v865 = vpop.f32.mrb[0].mxu0
        %866 = vdwg.mxu0
        %v869 = vunpack.c.l.b16 %v386
        %v870 = vunpack.c.l.b16 %v387
        %v871 = vpack.c.b16 %v870, %v869
        %v873 = vsel %vm819, %v377, 0
        %v876 = vsel %vm823, %v871, 0
        %878 = vmatprep.subr.bf16.mxu0 0
        %879 = vmatpush1.bf16.msra.mxu0 %v876
        %880 = vmatprep.subr.bf16.mxu0 0
        %881 = vmatpush1.bf16.msra.mxu0 0
        %882 = vmatprep.subr.bf16.mxu0 0
        %883 = vmatpush1.bf16.msra.mxu0 0
        %884 = vmatprep.subr.bf16.mxu0 0
        %885 = vmatpush1.bf16.msra.mxu0 0
        %886 = vmatprep.subr.bf16.mxu0 0
        %887 = vmatpush1.bf16.msra.mxu0 0
        %888 = vmatprep.subr.bf16.mxu0 0
        %889 = vmatpush1.bf16.msra.mxu0 0
        %890 = vmatprep.subr.bf16.mxu0 0
        %891 = vmatpush1.bf16.msra.mxu0 0
        %892 = vmatprep.subr.bf16.mxu0 0
        %893 = vmatpush1.bf16.msra.mxu0 0
        %894 = vmatprep.subr.bf16.mxu0 0
        %895 = vmatpush1.bf16.msra.mxu0 0
        %896 = vmatprep.subr.bf16.mxu0 0
        %897 = vmatpush1.bf16.msra.mxu0 0
        %898 = vmatprep.subr.bf16.mxu0 0
        %899 = vmatpush1.bf16.msra.mxu0 0
        %900 = vmatprep.subr.bf16.mxu0 0
        %901 = vmatpush1.bf16.msra.mxu0 0
        %902 = vmatprep.subr.bf16.mxu0 0
        %903 = vmatpush1.bf16.msra.mxu0 0
        %904 = vmatprep.subr.bf16.mxu0 0
        %905 = vmatpush1.bf16.msra.mxu0 0
        %906 = vmatprep.subr.bf16.mxu0 0
        %907 = vmatpush1.bf16.msra.mxu0 0
        %908 = vmatprep.subr.bf16.mxu0 0
        %909 = vmatpush1.bf16.msra.mxu0 0
        %910 = vmatprep.mubr.bf16.mxu0 0
        %911 = vmatmul.mubr.bf16.gmra.mrb[0].mxu0 %v873
        %v912 = vpop.f32.mrb[0].mxu0
        %v913 = vadd.f32 0.0, %v912
        %v914 = vpop.f32.mrb[0].mxu0
        %v915 = vpop.f32.mrb[0].mxu0
        %v916 = vpop.f32.mrb[0].mxu0
        %917 = vdwg.mxu0
        %v920 = vunpack.c.l.b16 %v388
        %v921 = vunpack.c.l.b16 %v389
        %v922 = vpack.c.b16 %v921, %v920
        %v924 = vsel %vm819, %v378, 0
        %v927 = vsel %vm823, %v922, 0
        %929 = vmatprep.subr.bf16.mxu0 0
        %930 = vmatpush1.bf16.msra.mxu0 %v927
        %931 = vmatprep.subr.bf16.mxu0 0
        %932 = vmatpush1.bf16.msra.mxu0 0
        %933 = vmatprep.subr.bf16.mxu0 0
        %934 = vmatpush1.bf16.msra.mxu0 0
        %935 = vmatprep.subr.bf16.mxu0 0
        %936 = vmatpush1.bf16.msra.mxu0 0
        %937 = vmatprep.subr.bf16.mxu0 0
        %938 = vmatpush1.bf16.msra.mxu0 0
        %939 = vmatprep.subr.bf16.mxu0 0
        %940 = vmatpush1.bf16.msra.mxu0 0
        %941 = vmatprep.subr.bf16.mxu0 0
        %942 = vmatpush1.bf16.msra.mxu0 0
        %943 = vmatprep.subr.bf16.mxu0 0
        %944 = vmatpush1.bf16.msra.mxu0 0
        %945 = vmatprep.subr.bf16.mxu0 0
        %946 = vmatpush1.bf16.msra.mxu0 0
        %947 = vmatprep.subr.bf16.mxu0 0
        %948 = vmatpush1.bf16.msra.mxu0 0
        %949 = vmatprep.subr.bf16.mxu0 0
        %950 = vmatpush1.bf16.msra.mxu0 0
        %951 = vmatprep.subr.bf16.mxu0 0
        %952 = vmatpush1.bf16.msra.mxu0 0
        %953 = vmatprep.subr.bf16.mxu0 0
        %954 = vmatpush1.bf16.msra.mxu0 0
        %955 = vmatprep.subr.bf16.mxu0 0
        %956 = vmatpush1.bf16.msra.mxu0 0
        %957 = vmatprep.subr.bf16.mxu0 0
        %958 = vmatpush1.bf16.msra.mxu0 0
        %959 = vmatprep.subr.bf16.mxu0 0
        %960 = vmatpush1.bf16.msra.mxu0 0
        %961 = vmatprep.mubr.bf16.mxu0 0
        %962 = vmatmul.mubr.bf16.gmra.mrb[0].mxu0 %v924
        %v963 = vpop.f32.mrb[0].mxu0
        %v964 = vadd.f32 0.0, %v963
        %v965 = vpop.f32.mrb[0].mxu0
        %v966 = vpop.f32.mrb[0].mxu0
        %v967 = vpop.f32.mrb[0].mxu0
        %968 = vdwg.mxu0
        %v971 = vunpack.c.l.b16 %v390
        %v972 = vunpack.c.l.b16 %v391
        %v973 = vpack.c.b16 %v972, %v971
        %v975 = vsel %vm819, %v379, 0
        %v978 = vsel %vm823, %v973, 0
        %980 = vmatprep.subr.bf16.mxu0 0
        %981 = vmatpush1.bf16.msra.mxu0 %v978
        %982 = vmatprep.subr.bf16.mxu0 0
        %983 = vmatpush1.bf16.msra.mxu0 0
        %984 = vmatprep.subr.bf16.mxu0 0
        %985 = vmatpush1.bf16.msra.mxu0 0
        %986 = vmatprep.subr.bf16.mxu0 0
        %987 = vmatpush1.bf16.msra.mxu0 0
        %988 = vmatprep.subr.bf16.mxu0 0
        %989 = vmatpush1.bf16.msra.mxu0 0
        %990 = vmatprep.subr.bf16.mxu0 0
        %991 = vmatpush1.bf16.msra.mxu0 0
        %992 = vmatprep.subr.bf16.mxu0 0
        %993 = vmatpush1.bf16.msra.mxu0 0
        %994 = vmatprep.subr.bf16.mxu0 0
        %995 = vmatpush1.bf16.msra.mxu0 0
        %996 = vmatprep.subr.bf16.mxu0 0
        %997 = vmatpush1.bf16.msra.mxu0 0
        %998 = vmatprep.subr.bf16.mxu0 0
        %999 = vmatpush1.bf16.msra.mxu0 0
        %1000 = vmatprep.subr.bf16.mxu0 0
        %1001 = vmatpush1.bf16.msra.mxu0 0
        %1002 = vmatprep.subr.bf16.mxu0 0
        %1003 = vmatpush1.bf16.msra.mxu0 0
        %1004 = vmatprep.subr.bf16.mxu0 0
        %1005 = vmatpush1.bf16.msra.mxu0 0
        %1006 = vmatprep.subr.bf16.mxu0 0
        %1007 = vmatpush1.bf16.msra.mxu0 0
        %1008 = vmatprep.subr.bf16.mxu0 0
        %1009 = vmatpush1.bf16.msra.mxu0 0
        %1010 = vmatprep.subr.bf16.mxu0 0
        %1011 = vmatpush1.bf16.msra.mxu0 0
        %1012 = vmatprep.mubr.bf16.mxu0 0
        %1013 = vmatmul.mubr.bf16.gmra.mrb[0].mxu0 %v975
        %v1014 = vpop.f32.mrb[0].mxu0
        %v1015 = vadd.f32 0.0, %v1014
        %v1016 = vpop.f32.mrb[0].mxu0
        %v1017 = vpop.f32.mrb[0].mxu0
        %v1018 = vpop.f32.mrb[0].mxu0
        %1019 = vdwg.mxu0
        %v1022 = vunpack.c.l.b16 %v392
        %v1023 = vunpack.c.l.b16 %v393
        %v1024 = vpack.c.b16 %v1023, %v1022
        %v1026 = vsel %vm819, %v380, 0
        %v1029 = vsel %vm823, %v1024, 0
        %1031 = vmatprep.subr.bf16.mxu0 0
        %1032 = vmatpush1.bf16.msra.mxu0 %v1029
        %1033 = vmatprep.subr.bf16.mxu0 0
        %1034 = vmatpush1.bf16.msra.mxu0 0
        %1035 = vmatprep.subr.bf16.mxu0 0
        %1036 = vmatpush1.bf16.msra.mxu0 0
        %1037 = vmatprep.subr.bf16.mxu0 0
        %1038 = vmatpush1.bf16.msra.mxu0 0
        %1039 = vmatprep.subr.bf16.mxu0 0
        %1040 = vmatpush1.bf16.msra.mxu0 0
        %1041 = vmatprep.subr.bf16.mxu0 0
        %1042 = vmatpush1.bf16.msra.mxu0 0
        %1043 = vmatprep.subr.bf16.mxu0 0
        %1044 = vmatpush1.bf16.msra.mxu0 0
        %1045 = vmatprep.subr.bf16.mxu0 0
        %1046 = vmatpush1.bf16.msra.mxu0 0
        %1047 = vmatprep.subr.bf16.mxu0 0
        %1048 = vmatpush1.bf16.msra.mxu0 0
        %1049 = vmatprep.subr.bf16.mxu0 0
        %1050 = vmatpush1.bf16.msra.mxu0 0
        %1051 = vmatprep.subr.bf16.mxu0 0
        %1052 = vmatpush1.bf16.msra.mxu0 0
        %1053 = vmatprep.subr.bf16.mxu0 0
        %1054 = vmatpush1.bf16.msra.mxu0 0
        %1055 = vmatprep.subr.bf16.mxu0 0
        %1056 = vmatpush1.bf16.msra.mxu0 0
        %1057 = vmatprep.subr.bf16.mxu0 0
        %1058 = vmatpush1.bf16.msra.mxu0 0
        %1059 = vmatprep.subr.bf16.mxu0 0
        %1060 = vmatpush1.bf16.msra.mxu0 0
        %1061 = vmatprep.subr.bf16.mxu0 0
        %1062 = vmatpush1.bf16.msra.mxu0 0
        %1063 = vmatprep.mubr.bf16.mxu0 0
        %1064 = vmatmul.mubr.bf16.gmra.mrb[0].mxu0 %v1026
        %v1065 = vpop.f32.mrb[0].mxu0
        %v1066 = vadd.f32 0.0, %v1065
        %v1067 = vpop.f32.mrb[0].mxu0
        %v1068 = vpop.f32.mrb[0].mxu0
        %v1069 = vpop.f32.mrb[0].mxu0
        %1070 = vdwg.mxu0
        %v1073 = vunpack.c.l.b16 %v394
        %v1074 = vunpack.c.l.b16 %v395
        %v1075 = vpack.c.b16 %v1074, %v1073
        %v1077 = vsel %vm819, %v381, 0
        %v1080 = vsel %vm823, %v1075, 0
        %1082 = vmatprep.subr.bf16.mxu0 0
        %1083 = vmatpush1.bf16.msra.mxu0 %v1080
        %1084 = vmatprep.subr.bf16.mxu0 0
        %1085 = vmatpush1.bf16.msra.mxu0 0
        %1086 = vmatprep.subr.bf16.mxu0 0
        %1087 = vmatpush1.bf16.msra.mxu0 0
        %1088 = vmatprep.subr.bf16.mxu0 0
        %1089 = vmatpush1.bf16.msra.mxu0 0
        %1090 = vmatprep.subr.bf16.mxu0 0
        %1091 = vmatpush1.bf16.msra.mxu0 0
        %1092 = vmatprep.subr.bf16.mxu0 0
        %1093 = vmatpush1.bf16.msra.mxu0 0
        %1094 = vmatprep.subr.bf16.mxu0 0
        %1095 = vmatpush1.bf16.msra.mxu0 0
        %1096 = vmatprep.subr.bf16.mxu0 0
        %1097 = vmatpush1.bf16.msra.mxu0 0
        %1098 = vmatprep.subr.bf16.mxu0 0
        %1099 = vmatpush1.bf16.msra.mxu0 0
        %1100 = vmatprep.subr.bf16.mxu0 0
        %1101 = vmatpush1.bf16.msra.mxu0 0
        %1102 = vmatprep.subr.bf16.mxu0 0
        %1103 = vmatpush1.bf16.msra.mxu0 0
        %1104 = vmatprep.subr.bf16.mxu0 0
        %1105 = vmatpush1.bf16.msra.mxu0 0
        %1106 = vmatprep.subr.bf16.mxu0 0
        %1107 = vmatpush1.bf16.msra.mxu0 0
        %1108 = vmatprep.subr.bf16.mxu0 0
        %1109 = vmatpush1.bf16.msra.mxu0 0
        %1110 = vmatprep.subr.bf16.mxu0 0
        %1111 = vmatpush1.bf16.msra.mxu0 0
        %1112 = vmatprep.subr.bf16.mxu0 0
        %1113 = vmatpush1.bf16.msra.mxu0 0
        %1114 = vmatprep.mubr.bf16.mxu0 0
        %1115 = vmatmul.mubr.bf16.gmra.mrb[0].mxu0 %v1077
        %v1116 = vpop.f32.mrb[0].mxu0
        %v1117 = vadd.f32 0.0, %v1116
        %v1118 = vpop.f32.mrb[0].mxu0
        %v1119 = vpop.f32.mrb[0].mxu0
        %v1120 = vpop.f32.mrb[0].mxu0
        %1121 = vdwg.mxu0
        %v1124 = vunpack.c.l.b16 %v396
        %v1125 = vunpack.c.l.b16 %v397
        %v1126 = vpack.c.b16 %v1125, %v1124
        %v1128 = vsel %vm819, %v382, 0
        %v1131 = vsel %vm823, %v1126, 0
        %1133 = vmatprep.subr.bf16.mxu0 0
        %1134 = vmatpush1.bf16.msra.mxu0 %v1131
        %1135 = vmatprep.subr.bf16.mxu0 0
        %1136 = vmatpush1.bf16.msra.mxu0 0
        %1137 = vmatprep.subr.bf16.mxu0 0
        %1138 = vmatpush1.bf16.msra.mxu0 0
        %1139 = vmatprep.subr.bf16.mxu0 0
        %1140 = vmatpush1.bf16.msra.mxu0 0
        %1141 = vmatprep.subr.bf16.mxu0 0
        %1142 = vmatpush1.bf16.msra.mxu0 0
        %1143 = vmatprep.subr.bf16.mxu0 0
        %1144 = vmatpush1.bf16.msra.mxu0 0
        %1145 = vmatprep.subr.bf16.mxu0 0
        %1146 = vmatpush1.bf16.msra.mxu0 0
        %1147 = vmatprep.subr.bf16.mxu0 0
        %1148 = vmatpush1.bf16.msra.mxu0 0
        %1149 = vmatprep.subr.bf16.mxu0 0
        %1150 = vmatpush1.bf16.msra.mxu0 0
        %1151 = vmatprep.subr.bf16.mxu0 0
        %1152 = vmatpush1.bf16.msra.mxu0 0
        %1153 = vmatprep.subr.bf16.mxu0 0
        %1154 = vmatpush1.bf16.msra.mxu0 0
        %1155 = vmatprep.subr.bf16.mxu0 0
        %1156 = vmatpush1.bf16.msra.mxu0 0
        %1157 = vmatprep.subr.bf16.mxu0 0
        %1158 = vmatpush1.bf16.msra.mxu0 0
        %1159 = vmatprep.subr.bf16.mxu0 0
        %1160 = vmatpush1.bf16.msra.mxu0 0
        %1161 = vmatprep.subr.bf16.mxu0 0
        %1162 = vmatpush1.bf16.msra.mxu0 0
        %1163 = vmatprep.subr.bf16.mxu0 0
        %1164 = vmatpush1.bf16.msra.mxu0 0
        %1165 = vmatprep.mubr.bf16.mxu0 0
        %1166 = vmatmul.mubr.bf16.gmra.mrb[0].mxu0 %v1128
        %v1167 = vpop.f32.mrb[0].mxu0
        %v1168 = vadd.f32 0.0, %v1167
        %v1169 = vpop.f32.mrb[0].mxu0
        %v1170 = vpop.f32.mrb[0].mxu0
        %v1171 = vpop.f32.mrb[0].mxu0
        %1172 = vdwg.mxu0
        %v1175 = vunpack.c.l.b16 %v398
        %v1176 = vunpack.c.l.b16 %v399
        %v1177 = vpack.c.b16 %v1176, %v1175
        %v1179 = vsel %vm819, %v383, 0
        %v1182 = vsel %vm823, %v1177, 0
        %1184 = vmatprep.subr.bf16.mxu0 0
        %1185 = vmatpush1.bf16.msra.mxu0 %v1182
        %1186 = vmatprep.subr.bf16.mxu0 0
        %1187 = vmatpush1.bf16.msra.mxu0 0
        %1188 = vmatprep.subr.bf16.mxu0 0
        %1189 = vmatpush1.bf16.msra.mxu0 0
        %1190 = vmatprep.subr.bf16.mxu0 0
        %1191 = vmatpush1.bf16.msra.mxu0 0
        %1192 = vmatprep.subr.bf16.mxu0 0
        %1193 = vmatpush1.bf16.msra.mxu0 0
        %1194 = vmatprep.subr.bf16.mxu0 0
        %1195 = vmatpush1.bf16.msra.mxu0 0
        %1196 = vmatprep.subr.bf16.mxu0 0
        %1197 = vmatpush1.bf16.msra.mxu0 0
        %1198 = vmatprep.subr.bf16.mxu0 0
        %1199 = vmatpush1.bf16.msra.mxu0 0
        %1200 = vmatprep.subr.bf16.mxu0 0
        %1201 = vmatpush1.bf16.msra.mxu0 0
        %1202 = vmatprep.subr.bf16.mxu0 0
        %1203 = vmatpush1.bf16.msra.mxu0 0
        %1204 = vmatprep.subr.bf16.mxu0 0
        %1205 = vmatpush1.bf16.msra.mxu0 0
        %1206 = vmatprep.subr.bf16.mxu0 0
        %1207 = vmatpush1.bf16.msra.mxu0 0
        %1208 = vmatprep.subr.bf16.mxu0 0
        %1209 = vmatpush1.bf16.msra.mxu0 0
        %1210 = vmatprep.subr.bf16.mxu0 0
        %1211 = vmatpush1.bf16.msra.mxu0 0
        %1212 = vmatprep.subr.bf16.mxu0 0
        %1213 = vmatpush1.bf16.msra.mxu0 0
        %1214 = vmatprep.subr.bf16.mxu0 0
        %1215 = vmatpush1.bf16.msra.mxu0 0
        %1216 = vmatprep.mubr.bf16.mxu0 0
        %1217 = vmatmul.mubr.bf16.gmra.mrb[0].mxu0 %v1179
        %v1218 = vpop.f32.mrb[0].mxu0
        %v1219 = vadd.f32 0.0, %v1218
        %v1220 = vpop.f32.mrb[0].mxu0
        %v1221 = vpop.f32.mrb[0].mxu0
        %v1222 = vpop.f32.mrb[0].mxu0
        %1223 = vdwg.mxu0
        %v1224 = vpack.c.bf16 %v862, %v862
        %v1225 = vpack.c.bf16 %v913, %v913
        %v1226 = vpack.c.bf16 %v964, %v964
        %v1227 = vpack.c.bf16 %v1015, %v1015
        %v1228 = vpack.c.bf16 %v1066, %v1066
        %v1229 = vpack.c.bf16 %v1117, %v1117
        %v1230 = vpack.c.bf16 %v1168, %v1168
        %v1231 = vpack.c.bf16 %v1219, %v1219
        %v1232 = vpack.c.bf16 %v503, %v452
        %v1233 = vpack.c.bf16 %v605, %v554
        %v1234 = vpack.c.bf16 %v707, %v656
        %v1235 = vpack.c.bf16 %v809, %v758
        %v1237 = vlaneseq
        %v1238 = vshrl.u32 %v1237, 7
        %v1239 = vsub.s32 0, %v1238
        %v1240 = vrot.slane %v402, %v1239
        %v1244 = vunpack.c.l.b16 %v400
        %v1245 = vunpack.c.l.b16 %v401
        %v1246 = vpack.c.b16 %v1245, %v1244
        %vm1248 = vcmask 130048
        %v1250 = vsel %vm1248, %v1232, 0
        %v1253 = vsel %vm1248, %v1233, 0
        %v1256 = vsel %vm1248, %v1234, 0
        %v1259 = vsel %vm1248, %v1235, 0
        %1261 = vmatprep.subr.bf16.mxu0 0
        %1262 = vmatpush1.bf16.msra.mxu0 %v1246
        %1263 = vmatprep.subr.bf16.mxu0 0
        %1264 = vmatpush1.bf16.msra.mxu0 0
        %1265 = vmatprep.subr.bf16.mxu0 0
        %1266 = vmatpush1.bf16.msra.mxu0 0
        %1267 = vmatprep.subr.bf16.mxu0 0
        %1268 = vmatpush1.bf16.msra.mxu0 0
        %1269 = vmatprep.subr.bf16.mxu0 0
        %1270 = vmatpush1.bf16.msra.mxu0 0
        %1271 = vmatprep.subr.bf16.mxu0 0
        %1272 = vmatpush1.bf16.msra.mxu0 0
        %1273 = vmatprep.subr.bf16.mxu0 0
        %1274 = vmatpush1.bf16.msra.mxu0 0
        %1275 = vmatprep.subr.bf16.mxu0 0
        %1276 = vmatpush1.bf16.msra.mxu0 0
        %1277 = vmatprep.subr.bf16.mxu0 0
        %1278 = vmatpush1.bf16.msra.mxu0 0
        %1279 = vmatprep.subr.bf16.mxu0 0
        %1280 = vmatpush1.bf16.msra.mxu0 0
        %1281 = vmatprep.subr.bf16.mxu0 0
        %1282 = vmatpush1.bf16.msra.mxu0 0
        %1283 = vmatprep.subr.bf16.mxu0 0
        %1284 = vmatpush1.bf16.msra.mxu0 0
        %1285 = vmatprep.subr.bf16.mxu0 0
        %1286 = vmatpush1.bf16.msra.mxu0 0
        %1287 = vmatprep.subr.bf16.mxu0 0
        %1288 = vmatpush1.bf16.msra.mxu0 0
        %1289 = vmatprep.subr.bf16.mxu0 0
        %1290 = vmatpush1.bf16.msra.mxu0 0
        %1291 = vmatprep.subr.bf16.mxu0 0
        %1292 = vmatpush1.bf16.msra.mxu0 0
        %1293 = vmatprep.mubr.bf16.mxu0 0
        %1294 = vmatmul.mubr.bf16.gmra.mrb[0].mxu0 %v1250
        %v1295 = vpop.f32.mrb[0].mxu0
        %v1296 = vadd.f32 %v1240, %v1295
        %v1297 = vpop.f32.mrb[0].mxu0
        %v1298 = vpop.f32.mrb[0].mxu0
        %v1299 = vadd.f32 %v1240, %v1298
        %v1300 = vpop.f32.mrb[0].mxu0
        %1301 = vmatprep.mubr.bf16.mxu0 0
        %1302 = vmatmul.mubr.bf16.gmra.mrb[0].mxu0 %v1253
        %v1303 = vpop.f32.mrb[0].mxu0
        %v1304 = vadd.f32 %v1240, %v1303
        %v1305 = vpop.f32.mrb[0].mxu0
        %v1306 = vpop.f32.mrb[0].mxu0
        %v1307 = vadd.f32 %v1240, %v1306
        %v1308 = vpop.f32.mrb[0].mxu0
        %1309 = vmatprep.mubr.bf16.mxu0 0
        %1310 = vmatmul.mubr.bf16.gmra.mrb[0].mxu0 %v1256
        %v1311 = vpop.f32.mrb[0].mxu0
        %v1312 = vadd.f32 %v1240, %v1311
        %v1313 = vpop.f32.mrb[0].mxu0
        %v1314 = vpop.f32.mrb[0].mxu0
        %v1315 = vadd.f32 %v1240, %v1314
        %v1316 = vpop.f32.mrb[0].mxu0
        %1317 = vmatprep.mubr.bf16.mxu0 0
        %1318 = vmatmul.mubr.bf16.gmra.mrb[0].mxu0 %v1259
        %v1319 = vpop.f32.mrb[0].mxu0
        %v1320 = vadd.f32 %v1240, %v1319
        %v1321 = vpop.f32.mrb[0].mxu0
        %v1322 = vpop.f32.mrb[0].mxu0
        %v1323 = vadd.f32 %v1240, %v1322
        %v1324 = vpop.f32.mrb[0].mxu0
        %1325 = vdwg.mxu0
        %v1326 = vpack.c.bf16 %v1296, %v1296
        %v1327 = vpack.c.bf16 %v1299, %v1299
        %v1328 = vpack.c.bf16 %v1304, %v1304
        %v1329 = vpack.c.bf16 %v1307, %v1307
        %v1330 = vpack.c.bf16 %v1312, %v1312
        %v1331 = vpack.c.bf16 %v1315, %v1315
        %v1332 = vpack.c.bf16 %v1320, %v1320
        %v1333 = vpack.c.bf16 %v1323, %v1323
        %1335 = vrot.lane.b32.xlu0 %v1326, 96
        %v1336 = vpop.permute.xlu0 %1335
        %vm1337 = vcmask 261120
        %v1339 = vsel %vm1337, %v1336, 0
        %v1342 = vsel %vm1337, %v1224, 0
        %1344 = vmatprep.subr.bf16.mxu0 0
        %1345 = vmatpush1.bf16.xpose.msra.mxu0 %v1342
        %1346 = vmatprep.subr.bf16.mxu0 0
        %1347 = vmatpush1.bf16.xpose.msra.mxu0 0
        %1348 = vmatprep.subr.bf16.mxu0 0
        %1349 = vmatpush1.bf16.xpose.msra.mxu0 0
        %1350 = vmatprep.subr.bf16.mxu0 0
        %1351 = vmatpush1.bf16.xpose.msra.mxu0 0
        %1352 = vmatprep.subr.bf16.mxu0 0
        %1353 = vmatpush1.bf16.xpose.msra.mxu0 0
        %1354 = vmatprep.subr.bf16.mxu0 0
        %1355 = vmatpush1.bf16.xpose.msra.mxu0 0
        %1356 = vmatprep.subr.bf16.mxu0 0
        %1357 = vmatpush1.bf16.xpose.msra.mxu0 0
        %1358 = vmatprep.subr.bf16.mxu0 0
        %1359 = vmatpush1.bf16.xpose.msra.mxu0 0
        %1360 = vmatprep.subr.bf16.mxu0 0
        %1361 = vmatpush1.bf16.xpose.msra.mxu0 0
        %1362 = vmatprep.subr.bf16.mxu0 0
        %1363 = vmatpush1.bf16.xpose.msra.mxu0 0
        %1364 = vmatprep.subr.bf16.mxu0 0
        %1365 = vmatpush1.bf16.xpose.msra.mxu0 0
        %1366 = vmatprep.subr.bf16.mxu0 0
        %1367 = vmatpush1.bf16.xpose.msra.mxu0 0
        %1368 = vmatprep.subr.bf16.mxu0 0
        %1369 = vmatpush1.bf16.xpose.msra.mxu0 0
        %1370 = vmatprep.subr.bf16.mxu0 0
        %1371 = vmatpush1.bf16.xpose.msra.mxu0 0
        %1372 = vmatprep.subr.bf16.mxu0 0
        %1373 = vmatpush1.bf16.xpose.msra.mxu0 0
        %1374 = vmatprep.subr.bf16.mxu0 0
        %1375 = vmatpush1.bf16.xpose.msra.mxu0 0
        %1376 = vmatprep.mubr.bf16.mxu0 0
        %1377 = vmatmul.mubr.bf16.gmra.mrb[0].mxu0 %v1339
        %v1378 = vpop.f32.mrb[0].mxu0
        %v1379 = vadd.f32 0.0, %v1378
        %v1380 = vpop.f32.mrb[0].mxu0
        %v1381 = vpop.f32.mrb[0].mxu0
        %v1382 = vpop.f32.mrb[0].mxu0
        %1383 = vdwg.mxu0
        %1385 = vrot.lane.b32.xlu0 %v1327, 96
        %v1386 = vpop.permute.xlu0 %1385
        %v1388 = vsel %vm1337, %v1386, 0
        %v1391 = vsel %vm1337, %v1225, 0
        %1393 = vmatprep.subr.bf16.mxu0 0
        %1394 = vmatpush1.bf16.xpose.msra.mxu0 %v1391
        %1395 = vmatprep.subr.bf16.mxu0 0
        %1396 = vmatpush1.bf16.xpose.msra.mxu0 0
        %1397 = vmatprep.subr.bf16.mxu0 0
        %1398 = vmatpush1.bf16.xpose.msra.mxu0 0
        %1399 = vmatprep.subr.bf16.mxu0 0
        %1400 = vmatpush1.bf16.xpose.msra.mxu0 0
        %1401 = vmatprep.subr.bf16.mxu0 0
        %1402 = vmatpush1.bf16.xpose.msra.mxu0 0
        %1403 = vmatprep.subr.bf16.mxu0 0
        %1404 = vmatpush1.bf16.xpose.msra.mxu0 0
        %1405 = vmatprep.subr.bf16.mxu0 0
        %1406 = vmatpush1.bf16.xpose.msra.mxu0 0
        %1407 = vmatprep.subr.bf16.mxu0 0
        %1408 = vmatpush1.bf16.xpose.msra.mxu0 0
        %1409 = vmatprep.subr.bf16.mxu0 0
        %1410 = vmatpush1.bf16.xpose.msra.mxu0 0
        %1411 = vmatprep.subr.bf16.mxu0 0
        %1412 = vmatpush1.bf16.xpose.msra.mxu0 0
        %1413 = vmatprep.subr.bf16.mxu0 0
        %1414 = vmatpush1.bf16.xpose.msra.mxu0 0
        %1415 = vmatprep.subr.bf16.mxu0 0
        %1416 = vmatpush1.bf16.xpose.msra.mxu0 0
        %1417 = vmatprep.subr.bf16.mxu0 0
        %1418 = vmatpush1.bf16.xpose.msra.mxu0 0
        %1419 = vmatprep.subr.bf16.mxu0 0
        %1420 = vmatpush1.bf16.xpose.msra.mxu0 0
        %1421 = vmatprep.subr.bf16.mxu0 0
        %1422 = vmatpush1.bf16.xpose.msra.mxu0 0
        %1423 = vmatprep.subr.bf16.mxu0 0
        %1424 = vmatpush1.bf16.xpose.msra.mxu0 0
        %1425 = vmatprep.mubr.bf16.mxu0 0
        %1426 = vmatmul.mubr.bf16.gmra.mrb[0].mxu0 %v1388
        %v1427 = vpop.f32.mrb[0].mxu0
        %v1428 = vadd.f32 0.0, %v1427
        %v1429 = vpop.f32.mrb[0].mxu0
        %v1430 = vpop.f32.mrb[0].mxu0
        %v1431 = vpop.f32.mrb[0].mxu0
        %1432 = vdwg.mxu0
        %1434 = vrot.lane.b32.xlu0 %v1328, 96
        %v1435 = vpop.permute.xlu0 %1434
        %v1437 = vsel %vm1337, %v1435, 0
        %v1440 = vsel %vm1337, %v1226, 0
        %1442 = vmatprep.subr.bf16.mxu0 0
        %1443 = vmatpush1.bf16.xpose.msra.mxu0 %v1440
        %1444 = vmatprep.subr.bf16.mxu0 0
        %1445 = vmatpush1.bf16.xpose.msra.mxu0 0
        %1446 = vmatprep.subr.bf16.mxu0 0
        %1447 = vmatpush1.bf16.xpose.msra.mxu0 0
        %1448 = vmatprep.subr.bf16.mxu0 0
        %1449 = vmatpush1.bf16.xpose.msra.mxu0 0
        %1450 = vmatprep.subr.bf16.mxu0 0
        %1451 = vmatpush1.bf16.xpose.msra.mxu0 0
        %1452 = vmatprep.subr.bf16.mxu0 0
        %1453 = vmatpush1.bf16.xpose.msra.mxu0 0
        %1454 = vmatprep.subr.bf16.mxu0 0
        %1455 = vmatpush1.bf16.xpose.msra.mxu0 0
        %1456 = vmatprep.subr.bf16.mxu0 0
        %1457 = vmatpush1.bf16.xpose.msra.mxu0 0
        %1458 = vmatprep.subr.bf16.mxu0 0
        %1459 = vmatpush1.bf16.xpose.msra.mxu0 0
        %1460 = vmatprep.subr.bf16.mxu0 0
        %1461 = vmatpush1.bf16.xpose.msra.mxu0 0
        %1462 = vmatprep.subr.bf16.mxu0 0
        %1463 = vmatpush1.bf16.xpose.msra.mxu0 0
        %1464 = vmatprep.subr.bf16.mxu0 0
        %1465 = vmatpush1.bf16.xpose.msra.mxu0 0
        %1466 = vmatprep.subr.bf16.mxu0 0
        %1467 = vmatpush1.bf16.xpose.msra.mxu0 0
        %1468 = vmatprep.subr.bf16.mxu0 0
        %1469 = vmatpush1.bf16.xpose.msra.mxu0 0
        %1470 = vmatprep.subr.bf16.mxu0 0
        %1471 = vmatpush1.bf16.xpose.msra.mxu0 0
        %1472 = vmatprep.subr.bf16.mxu0 0
        %1473 = vmatpush1.bf16.xpose.msra.mxu0 0
        %1474 = vmatprep.mubr.bf16.mxu0 0
        %1475 = vmatmul.mubr.bf16.gmra.mrb[0].mxu0 %v1437
        %v1476 = vpop.f32.mrb[0].mxu0
        %v1477 = vadd.f32 0.0, %v1476
        %v1478 = vpop.f32.mrb[0].mxu0
        %v1479 = vpop.f32.mrb[0].mxu0
        %v1480 = vpop.f32.mrb[0].mxu0
        %1481 = vdwg.mxu0
        %1483 = vrot.lane.b32.xlu0 %v1329, 96
        %v1484 = vpop.permute.xlu0 %1483
        %v1486 = vsel %vm1337, %v1484, 0
        %v1489 = vsel %vm1337, %v1227, 0
        %1491 = vmatprep.subr.bf16.mxu0 0
        %1492 = vmatpush1.bf16.xpose.msra.mxu0 %v1489
        %1493 = vmatprep.subr.bf16.mxu0 0
        %1494 = vmatpush1.bf16.xpose.msra.mxu0 0
        %1495 = vmatprep.subr.bf16.mxu0 0
        %1496 = vmatpush1.bf16.xpose.msra.mxu0 0
        %1497 = vmatprep.subr.bf16.mxu0 0
        %1498 = vmatpush1.bf16.xpose.msra.mxu0 0
        %1499 = vmatprep.subr.bf16.mxu0 0
        %1500 = vmatpush1.bf16.xpose.msra.mxu0 0
        %1501 = vmatprep.subr.bf16.mxu0 0
        %1502 = vmatpush1.bf16.xpose.msra.mxu0 0
        %1503 = vmatprep.subr.bf16.mxu0 0
        %1504 = vmatpush1.bf16.xpose.msra.mxu0 0
        %1505 = vmatprep.subr.bf16.mxu0 0
        %1506 = vmatpush1.bf16.xpose.msra.mxu0 0
        %1507 = vmatprep.subr.bf16.mxu0 0
        %1508 = vmatpush1.bf16.xpose.msra.mxu0 0
        %1509 = vmatprep.subr.bf16.mxu0 0
        %1510 = vmatpush1.bf16.xpose.msra.mxu0 0
        %1511 = vmatprep.subr.bf16.mxu0 0
        %1512 = vmatpush1.bf16.xpose.msra.mxu0 0
        %1513 = vmatprep.subr.bf16.mxu0 0
        %1514 = vmatpush1.bf16.xpose.msra.mxu0 0
        %1515 = vmatprep.subr.bf16.mxu0 0
        %1516 = vmatpush1.bf16.xpose.msra.mxu0 0
        %1517 = vmatprep.subr.bf16.mxu0 0
        %1518 = vmatpush1.bf16.xpose.msra.mxu0 0
        %1519 = vmatprep.subr.bf16.mxu0 0
        %1520 = vmatpush1.bf16.xpose.msra.mxu0 0
        %1521 = vmatprep.subr.bf16.mxu0 0
        %1522 = vmatpush1.bf16.xpose.msra.mxu0 0
        %1523 = vmatprep.mubr.bf16.mxu0 0
        %1524 = vmatmul.mubr.bf16.gmra.mrb[0].mxu0 %v1486
        %v1525 = vpop.f32.mrb[0].mxu0
        %v1526 = vadd.f32 0.0, %v1525
        %v1527 = vpop.f32.mrb[0].mxu0
        %v1528 = vpop.f32.mrb[0].mxu0
        %v1529 = vpop.f32.mrb[0].mxu0
        %1530 = vdwg.mxu0
        %1532 = vrot.lane.b32.xlu0 %v1330, 96
        %v1533 = vpop.permute.xlu0 %1532
        %v1535 = vsel %vm1337, %v1533, 0
        %v1538 = vsel %vm1337, %v1228, 0
        %1540 = vmatprep.subr.bf16.mxu0 0
        %1541 = vmatpush1.bf16.xpose.msra.mxu0 %v1538
        %1542 = vmatprep.subr.bf16.mxu0 0
        %1543 = vmatpush1.bf16.xpose.msra.mxu0 0
        %1544 = vmatprep.subr.bf16.mxu0 0
        %1545 = vmatpush1.bf16.xpose.msra.mxu0 0
        %1546 = vmatprep.subr.bf16.mxu0 0
        %1547 = vmatpush1.bf16.xpose.msra.mxu0 0
        %1548 = vmatprep.subr.bf16.mxu0 0
        %1549 = vmatpush1.bf16.xpose.msra.mxu0 0
        %1550 = vmatprep.subr.bf16.mxu0 0
        %1551 = vmatpush1.bf16.xpose.msra.mxu0 0
        %1552 = vmatprep.subr.bf16.mxu0 0
        %1553 = vmatpush1.bf16.xpose.msra.mxu0 0
        %1554 = vmatprep.subr.bf16.mxu0 0
        %1555 = vmatpush1.bf16.xpose.msra.mxu0 0
        %1556 = vmatprep.subr.bf16.mxu0 0
        %1557 = vmatpush1.bf16.xpose.msra.mxu0 0
        %1558 = vmatprep.subr.bf16.mxu0 0
        %1559 = vmatpush1.bf16.xpose.msra.mxu0 0
        %1560 = vmatprep.subr.bf16.mxu0 0
        %1561 = vmatpush1.bf16.xpose.msra.mxu0 0
        %1562 = vmatprep.subr.bf16.mxu0 0
        %1563 = vmatpush1.bf16.xpose.msra.mxu0 0
        %1564 = vmatprep.subr.bf16.mxu0 0
        %1565 = vmatpush1.bf16.xpose.msra.mxu0 0
        %1566 = vmatprep.subr.bf16.mxu0 0
        %1567 = vmatpush1.bf16.xpose.msra.mxu0 0
        %1568 = vmatprep.subr.bf16.mxu0 0
        %1569 = vmatpush1.bf16.xpose.msra.mxu0 0
        %1570 = vmatprep.subr.bf16.mxu0 0
        %1571 = vmatpush1.bf16.xpose.msra.mxu0 0
        %1572 = vmatprep.mubr.bf16.mxu0 0
        %1573 = vmatmul.mubr.bf16.gmra.mrb[0].mxu0 %v1535
        %v1574 = vpop.f32.mrb[0].mxu0
        %v1575 = vadd.f32 0.0, %v1574
        %v1576 = vpop.f32.mrb[0].mxu0
        %v1577 = vpop.f32.mrb[0].mxu0
        %v1578 = vpop.f32.mrb[0].mxu0
        %1579 = vdwg.mxu0
        %1581 = vrot.lane.b32.xlu0 %v1331, 96
        %v1582 = vpop.permute.xlu0 %1581
        %v1584 = vsel %vm1337, %v1582, 0
        %v1587 = vsel %vm1337, %v1229, 0
        %1589 = vmatprep.subr.bf16.mxu0 0
        %1590 = vmatpush1.bf16.xpose.msra.mxu0 %v1587
        %1591 = vmatprep.subr.bf16.mxu0 0
        %1592 = vmatpush1.bf16.xpose.msra.mxu0 0
        %1593 = vmatprep.subr.bf16.mxu0 0
        %1594 = vmatpush1.bf16.xpose.msra.mxu0 0
        %1595 = vmatprep.subr.bf16.mxu0 0
        %1596 = vmatpush1.bf16.xpose.msra.mxu0 0
        %1597 = vmatprep.subr.bf16.mxu0 0
        %1598 = vmatpush1.bf16.xpose.msra.mxu0 0
        %1599 = vmatprep.subr.bf16.mxu0 0
        %1600 = vmatpush1.bf16.xpose.msra.mxu0 0
        %1601 = vmatprep.subr.bf16.mxu0 0
        %1602 = vmatpush1.bf16.xpose.msra.mxu0 0
        %1603 = vmatprep.subr.bf16.mxu0 0
        %1604 = vmatpush1.bf16.xpose.msra.mxu0 0
        %1605 = vmatprep.subr.bf16.mxu0 0
        %1606 = vmatpush1.bf16.xpose.msra.mxu0 0
        %1607 = vmatprep.subr.bf16.mxu0 0
        %1608 = vmatpush1.bf16.xpose.msra.mxu0 0
        %1609 = vmatprep.subr.bf16.mxu0 0
        %1610 = vmatpush1.bf16.xpose.msra.mxu0 0
        %1611 = vmatprep.subr.bf16.mxu0 0
        %1612 = vmatpush1.bf16.xpose.msra.mxu0 0
        %1613 = vmatprep.subr.bf16.mxu0 0
        %1614 = vmatpush1.bf16.xpose.msra.mxu0 0
        %1615 = vmatprep.subr.bf16.mxu0 0
        %1616 = vmatpush1.bf16.xpose.msra.mxu0 0
        %1617 = vmatprep.subr.bf16.mxu0 0
        %1618 = vmatpush1.bf16.xpose.msra.mxu0 0
        %1619 = vmatprep.subr.bf16.mxu0 0
        %1620 = vmatpush1.bf16.xpose.msra.mxu0 0
        %1621 = vmatprep.mubr.bf16.mxu0 0
        %1622 = vmatmul.mubr.bf16.gmra.mrb[0].mxu0 %v1584
        %v1623 = vpop.f32.mrb[0].mxu0
        %v1624 = vadd.f32 0.0, %v1623
        %v1625 = vpop.f32.mrb[0].mxu0
        %v1626 = vpop.f32.mrb[0].mxu0
        %v1627 = vpop.f32.mrb[0].mxu0
        %1628 = vdwg.mxu0
        %1630 = vrot.lane.b32.xlu0 %v1332, 96
        %v1631 = vpop.permute.xlu0 %1630
        %v1633 = vsel %vm1337, %v1631, 0
        %v1636 = vsel %vm1337, %v1230, 0
        %1638 = vmatprep.subr.bf16.mxu0 0
        %1639 = vmatpush1.bf16.xpose.msra.mxu0 %v1636
        %1640 = vmatprep.subr.bf16.mxu0 0
        %1641 = vmatpush1.bf16.xpose.msra.mxu0 0
        %1642 = vmatprep.subr.bf16.mxu0 0
        %1643 = vmatpush1.bf16.xpose.msra.mxu0 0
        %1644 = vmatprep.subr.bf16.mxu0 0
        %1645 = vmatpush1.bf16.xpose.msra.mxu0 0
        %1646 = vmatprep.subr.bf16.mxu0 0
        %1647 = vmatpush1.bf16.xpose.msra.mxu0 0
        %1648 = vmatprep.subr.bf16.mxu0 0
        %1649 = vmatpush1.bf16.xpose.msra.mxu0 0
        %1650 = vmatprep.subr.bf16.mxu0 0
        %1651 = vmatpush1.bf16.xpose.msra.mxu0 0
        %1652 = vmatprep.subr.bf16.mxu0 0
        %1653 = vmatpush1.bf16.xpose.msra.mxu0 0
        %1654 = vmatprep.subr.bf16.mxu0 0
        %1655 = vmatpush1.bf16.xpose.msra.mxu0 0
        %1656 = vmatprep.subr.bf16.mxu0 0
        %1657 = vmatpush1.bf16.xpose.msra.mxu0 0
        %1658 = vmatprep.subr.bf16.mxu0 0
        %1659 = vmatpush1.bf16.xpose.msra.mxu0 0
        %1660 = vmatprep.subr.bf16.mxu0 0
        %1661 = vmatpush1.bf16.xpose.msra.mxu0 0
        %1662 = vmatprep.subr.bf16.mxu0 0
        %1663 = vmatpush1.bf16.xpose.msra.mxu0 0
        %1664 = vmatprep.subr.bf16.mxu0 0
        %1665 = vmatpush1.bf16.xpose.msra.mxu0 0
        %1666 = vmatprep.subr.bf16.mxu0 0
        %1667 = vmatpush1.bf16.xpose.msra.mxu0 0
        %1668 = vmatprep.subr.bf16.mxu0 0
        %1669 = vmatpush1.bf16.xpose.msra.mxu0 0
        %1670 = vmatprep.mubr.bf16.mxu0 0
        %1671 = vmatmul.mubr.bf16.gmra.mrb[0].mxu0 %v1633
        %v1672 = vpop.f32.mrb[0].mxu0
        %v1673 = vadd.f32 0.0, %v1672
        %v1674 = vpop.f32.mrb[0].mxu0
        %v1675 = vpop.f32.mrb[0].mxu0
        %v1676 = vpop.f32.mrb[0].mxu0
        %1677 = vdwg.mxu0
        %1679 = vrot.lane.b32.xlu0 %v1333, 96
        %v1680 = vpop.permute.xlu0 %1679
        %v1682 = vsel %vm1337, %v1680, 0
        %v1685 = vsel %vm1337, %v1231, 0
        %1687 = vmatprep.subr.bf16.mxu0 0
        %1688 = vmatpush1.bf16.xpose.msra.mxu0 %v1685
        %1689 = vmatprep.subr.bf16.mxu0 0
        %1690 = vmatpush1.bf16.xpose.msra.mxu0 0
        %1691 = vmatprep.subr.bf16.mxu0 0
        %1692 = vmatpush1.bf16.xpose.msra.mxu0 0
        %1693 = vmatprep.subr.bf16.mxu0 0
        %1694 = vmatpush1.bf16.xpose.msra.mxu0 0
        %1695 = vmatprep.subr.bf16.mxu0 0
        %1696 = vmatpush1.bf16.xpose.msra.mxu0 0
        %1697 = vmatprep.subr.bf16.mxu0 0
        %1698 = vmatpush1.bf16.xpose.msra.mxu0 0
        %1699 = vmatprep.subr.bf16.mxu0 0
        %1700 = vmatpush1.bf16.xpose.msra.mxu0 0
        %1701 = vmatprep.subr.bf16.mxu0 0
        %1702 = vmatpush1.bf16.xpose.msra.mxu0 0
        %1703 = vmatprep.subr.bf16.mxu0 0
        %1704 = vmatpush1.bf16.xpose.msra.mxu0 0
        %1705 = vmatprep.subr.bf16.mxu0 0
        %1706 = vmatpush1.bf16.xpose.msra.mxu0 0
        %1707 = vmatprep.subr.bf16.mxu0 0
        %1708 = vmatpush1.bf16.xpose.msra.mxu0 0
        %1709 = vmatprep.subr.bf16.mxu0 0
        %1710 = vmatpush1.bf16.xpose.msra.mxu0 0
        %1711 = vmatprep.subr.bf16.mxu0 0
        %1712 = vmatpush1.bf16.xpose.msra.mxu0 0
        %1713 = vmatprep.subr.bf16.mxu0 0
        %1714 = vmatpush1.bf16.xpose.msra.mxu0 0
        %1715 = vmatprep.subr.bf16.mxu0 0
        %1716 = vmatpush1.bf16.xpose.msra.mxu0 0
        %1717 = vmatprep.subr.bf16.mxu0 0
        %1718 = vmatpush1.bf16.xpose.msra.mxu0 0
        %1719 = vmatprep.mubr.bf16.mxu0 0
        %1720 = vmatmul.mubr.bf16.gmra.mrb[0].mxu0 %v1682
        %v1721 = vpop.f32.mrb[0].mxu0
        %v1722 = vadd.f32 0.0, %v1721
        %v1723 = vpop.f32.mrb[0].mxu0
        %v1724 = vpop.f32.mrb[0].mxu0
        %v1725 = vpop.f32.mrb[0].mxu0
        %1726 = vdwg.mxu0
        %v1727 = vtanh.pop %v1379
        %v1728 = vtanh.pop %v1428
        %v1729 = vtanh.pop %v1477
        %v1730 = vtanh.pop %v1526
        %v1731 = vtanh.pop %v1575
        %v1732 = vtanh.pop %v1624
        %v1733 = vtanh.pop %v1673
        %v1734 = vtanh.pop %v1722
        %vm1735 = vcmask 64512
        %v1736 = vsel %vm1735, %v1727, -inf
        %1737 = vmax.xlane.f32.xlu0 %v1736
        %v1738 = vpop.xlane.xlu0 %1737
        %v1739 = vsel %vm1735, %v1728, -inf
        %1740 = vmax.xlane.f32.xlu0 %v1739
        %v1741 = vpop.xlane.xlu0 %1740
        %v1742 = vsel %vm1735, %v1729, -inf
        %1743 = vmax.xlane.f32.xlu0 %v1742
        %v1744 = vpop.xlane.xlu0 %1743
        %v1745 = vsel %vm1735, %v1730, -inf
        %1746 = vmax.xlane.f32.xlu0 %v1745
        %v1747 = vpop.xlane.xlu0 %1746
        %v1748 = vsel %vm1735, %v1731, -inf
        %1749 = vmax.xlane.f32.xlu0 %v1748
        %v1750 = vpop.xlane.xlu0 %1749
        %v1751 = vsel %vm1735, %v1732, -inf
        %1752 = vmax.xlane.f32.xlu0 %v1751
        %v1753 = vpop.xlane.xlu0 %1752
        %v1754 = vsel %vm1735, %v1733, -inf
        %1755 = vmax.xlane.f32.xlu0 %v1754
        %v1756 = vpop.xlane.xlu0 %1755
        %v1757 = vsel %vm1735, %v1734, -inf
        %1758 = vmax.xlane.f32.xlu0 %v1757
        %v1759 = vpop.xlane.xlu0 %1758
        %v1760 = vrot.slane %v1736, 4
        %v1761 = vmax.f32 %v1736, %v1760
        %v1762 = vrot.slane %v1761, 2
        %v1763 = vmax.f32 %v1761, %v1762
        %v1764 = vrot.slane %v1763, 1
        %v1765 = vmax.f32 %v1763, %v1764
        %v1766 = vrot.slane %v1739, 4
        %v1767 = vmax.f32 %v1739, %v1766
        %v1768 = vrot.slane %v1767, 2
        %v1769 = vmax.f32 %v1767, %v1768
        %v1770 = vrot.slane %v1769, 1
        %v1771 = vmax.f32 %v1769, %v1770
        %v1772 = vrot.slane %v1742, 4
        %v1773 = vmax.f32 %v1742, %v1772
        %v1774 = vrot.slane %v1773, 2
        %v1775 = vmax.f32 %v1773, %v1774
        %v1776 = vrot.slane %v1775, 1
        %v1777 = vmax.f32 %v1775, %v1776
        %v1778 = vrot.slane %v1745, 4
        %v1779 = vmax.f32 %v1745, %v1778
        %v1780 = vrot.slane %v1779, 2
        %v1781 = vmax.f32 %v1779, %v1780
        %v1782 = vrot.slane %v1781, 1
        %v1783 = vmax.f32 %v1781, %v1782
        %v1784 = vrot.slane %v1748, 4
        %v1785 = vmax.f32 %v1748, %v1784
        %v1786 = vrot.slane %v1785, 2
        %v1787 = vmax.f32 %v1785, %v1786
        %v1788 = vrot.slane %v1787, 1
        %v1789 = vmax.f32 %v1787, %v1788
        %v1790 = vrot.slane %v1751, 4
        %v1791 = vmax.f32 %v1751, %v1790
        %v1792 = vrot.slane %v1791, 2
        %v1793 = vmax.f32 %v1791, %v1792
        %v1794 = vrot.slane %v1793, 1
        %v1795 = vmax.f32 %v1793, %v1794
        %v1796 = vrot.slane %v1754, 4
        %v1797 = vmax.f32 %v1754, %v1796
        %v1798 = vrot.slane %v1797, 2
        %v1799 = vmax.f32 %v1797, %v1798
        %v1800 = vrot.slane %v1799, 1
        %v1801 = vmax.f32 %v1799, %v1800
        %v1802 = vrot.slane %v1757, 4
        %v1803 = vmax.f32 %v1757, %v1802
        %v1804 = vrot.slane %v1803, 2
        %v1805 = vmax.f32 %v1803, %v1804
        %v1806 = vrot.slane %v1805, 1
        %v1807 = vmax.f32 %v1805, %v1806
        %vm1808 = vcmp.eq.f32.partialorder %v1738, 0.0
        %vm1809 = vcmp.eq.f32.partialorder %v1741, 0.0
        %vm1810 = vcmp.eq.f32.partialorder %v1744, 0.0
        %vm1811 = vcmp.eq.f32.partialorder %v1747, 0.0
        %vm1812 = vcmp.eq.f32.partialorder %v1750, 0.0
        %vm1813 = vcmp.eq.f32.partialorder %v1753, 0.0
        %vm1814 = vcmp.eq.f32.partialorder %v1756, 0.0
        %vm1815 = vcmp.eq.f32.partialorder %v1759, 0.0
        %v1816 = vsel %vm1808, -1e+09, %v1738
        %v1817 = vsel %vm1809, -1e+09, %v1741
        %v1818 = vsel %vm1810, -1e+09, %v1744
        %v1819 = vsel %vm1811, -1e+09, %v1747
        %v1820 = vsel %vm1812, -1e+09, %v1750
        %v1821 = vsel %vm1813, -1e+09, %v1753
        %v1822 = vsel %vm1814, -1e+09, %v1756
        %v1823 = vsel %vm1815, -1e+09, %v1759
        %vm1824 = vcmp.eq.f32.partialorder %v1765, 0.0
        %vm1825 = vcmp.eq.f32.partialorder %v1771, 0.0
        %vm1826 = vcmp.eq.f32.partialorder %v1777, 0.0
        %vm1827 = vcmp.eq.f32.partialorder %v1783, 0.0
        %vm1828 = vcmp.eq.f32.partialorder %v1789, 0.0
        %vm1829 = vcmp.eq.f32.partialorder %v1795, 0.0
        %vm1830 = vcmp.eq.f32.partialorder %v1801, 0.0
        %vm1831 = vcmp.eq.f32.partialorder %v1807, 0.0
        %v1832 = vsel %vm1824, -1e+09, %v1765
        %v1833 = vsel %vm1825, -1e+09, %v1771
        %v1834 = vsel %vm1826, -1e+09, %v1777
        %v1835 = vsel %vm1827, -1e+09, %v1783
        %v1836 = vsel %vm1828, -1e+09, %v1789
        %v1837 = vsel %vm1829, -1e+09, %v1795
        %v1838 = vsel %vm1830, -1e+09, %v1801
        %v1839 = vsel %vm1831, -1e+09, %v1807
        %v1840 = vrot.slane %v1816, 4
        %v1841 = vmax.f32 %v1816, %v1840
        %v1842 = vrot.slane %v1841, 2
        %v1843 = vmax.f32 %v1841, %v1842
        %v1844 = vrot.slane %v1843, 1
        %v1845 = vmax.f32 %v1843, %v1844
        %v1846 = vrot.slane %v1817, 4
        %v1847 = vmax.f32 %v1817, %v1846
        %v1848 = vrot.slane %v1847, 2
        %v1849 = vmax.f32 %v1847, %v1848
        %v1850 = vrot.slane %v1849, 1
        %v1851 = vmax.f32 %v1849, %v1850
        %v1852 = vrot.slane %v1818, 4
        %v1853 = vmax.f32 %v1818, %v1852
        %v1854 = vrot.slane %v1853, 2
        %v1855 = vmax.f32 %v1853, %v1854
        %v1856 = vrot.slane %v1855, 1
        %v1857 = vmax.f32 %v1855, %v1856
        %v1858 = vrot.slane %v1819, 4
        %v1859 = vmax.f32 %v1819, %v1858
        %v1860 = vrot.slane %v1859, 2
        %v1861 = vmax.f32 %v1859, %v1860
        %v1862 = vrot.slane %v1861, 1
        %v1863 = vmax.f32 %v1861, %v1862
        %v1864 = vrot.slane %v1820, 4
        %v1865 = vmax.f32 %v1820, %v1864
        %v1866 = vrot.slane %v1865, 2
        %v1867 = vmax.f32 %v1865, %v1866
        %v1868 = vrot.slane %v1867, 1
        %v1869 = vmax.f32 %v1867, %v1868
        %v1870 = vrot.slane %v1821, 4
        %v1871 = vmax.f32 %v1821, %v1870
        %v1872 = vrot.slane %v1871, 2
        %v1873 = vmax.f32 %v1871, %v1872
        %v1874 = vrot.slane %v1873, 1
        %v1875 = vmax.f32 %v1873, %v1874
        %v1876 = vrot.slane %v1822, 4
        %v1877 = vmax.f32 %v1822, %v1876
        %v1878 = vrot.slane %v1877, 2
        %v1879 = vmax.f32 %v1877, %v1878
        %v1880 = vrot.slane %v1879, 1
        %v1881 = vmax.f32 %v1879, %v1880
        %v1882 = vrot.slane %v1823, 4
        %v1883 = vmax.f32 %v1823, %v1882
        %v1884 = vrot.slane %v1883, 2
        %v1885 = vmax.f32 %v1883, %v1884
        %v1886 = vrot.slane %v1885, 1
        %v1887 = vmax.f32 %v1885, %v1886
        %v1888 = vsub.f32 %v1816, %v1845
        %v1889 = vsub.f32 %v1817, %v1851
        %v1890 = vsub.f32 %v1818, %v1857
        %v1891 = vsub.f32 %v1819, %v1863
        %v1892 = vsub.f32 %v1820, %v1869
        %v1893 = vsub.f32 %v1821, %v1875
        %v1894 = vsub.f32 %v1822, %v1881
        %v1895 = vsub.f32 %v1823, %v1887
        %v1896 = vmul.f32 %v1888, 1.442695
        %v1897 = vpow.pop %v1896
        %v1898 = vmul.f32 %v1889, 1.442695
        %v1899 = vpow.pop %v1898
        %v1900 = vmul.f32 %v1890, 1.442695
        %v1901 = vpow.pop %v1900
        %v1902 = vmul.f32 %v1891, 1.442695
        %v1903 = vpow.pop %v1902
        %v1904 = vmul.f32 %v1892, 1.442695
        %v1905 = vpow.pop %v1904
        %v1906 = vmul.f32 %v1893, 1.442695
        %v1907 = vpow.pop %v1906
        %v1908 = vmul.f32 %v1894, 1.442695
        %v1909 = vpow.pop %v1908
        %v1910 = vmul.f32 %v1895, 1.442695
        %v1911 = vpow.pop %v1910
        %v1912 = vrot.slane %v1897, 4
        %v1913 = vadd.f32 %v1897, %v1912
        %v1914 = vrot.slane %v1913, 2
        %v1915 = vadd.f32 %v1913, %v1914
        %v1916 = vrot.slane %v1915, 1
        %v1917 = vadd.f32 %v1915, %v1916
        %v1918 = vrot.slane %v1899, 4
        %v1919 = vadd.f32 %v1899, %v1918
        %v1920 = vrot.slane %v1919, 2
        %v1921 = vadd.f32 %v1919, %v1920
        %v1922 = vrot.slane %v1921, 1
        %v1923 = vadd.f32 %v1921, %v1922
        %v1924 = vrot.slane %v1901, 4
        %v1925 = vadd.f32 %v1901, %v1924
        %v1926 = vrot.slane %v1925, 2
        %v1927 = vadd.f32 %v1925, %v1926
        %v1928 = vrot.slane %v1927, 1
        %v1929 = vadd.f32 %v1927, %v1928
        %v1930 = vrot.slane %v1903, 4
        %v1931 = vadd.f32 %v1903, %v1930
        %v1932 = vrot.slane %v1931, 2
        %v1933 = vadd.f32 %v1931, %v1932
        %v1934 = vrot.slane %v1933, 1
        %v1935 = vadd.f32 %v1933, %v1934
        %v1936 = vrot.slane %v1905, 4
        %v1937 = vadd.f32 %v1905, %v1936
        %v1938 = vrot.slane %v1937, 2
        %v1939 = vadd.f32 %v1937, %v1938
        %v1940 = vrot.slane %v1939, 1
        %v1941 = vadd.f32 %v1939, %v1940
        %v1942 = vrot.slane %v1907, 4
        %v1943 = vadd.f32 %v1907, %v1942
        %v1944 = vrot.slane %v1943, 2
        %v1945 = vadd.f32 %v1943, %v1944
        %v1946 = vrot.slane %v1945, 1
        %v1947 = vadd.f32 %v1945, %v1946
        %v1948 = vrot.slane %v1909, 4
        %v1949 = vadd.f32 %v1909, %v1948
        %v1950 = vrot.slane %v1949, 2
        %v1951 = vadd.f32 %v1949, %v1950
        %v1952 = vrot.slane %v1951, 1
        %v1953 = vadd.f32 %v1951, %v1952
        %v1954 = vrot.slane %v1911, 4
        %v1955 = vadd.f32 %v1911, %v1954
        %v1956 = vrot.slane %v1955, 2
        %v1957 = vadd.f32 %v1955, %v1956
        %v1958 = vrot.slane %v1957, 1
        %v1959 = vadd.f32 %v1957, %v1958
        %v1960 = vrcp.pop %v1917
        %v1961 = vrcp.pop %v1923
        %v1962 = vrcp.pop %v1929
        %v1963 = vrcp.pop %v1935
        %v1964 = vrcp.pop %v1941
        %v1965 = vrcp.pop %v1947
        %v1966 = vrcp.pop %v1953
        %v1967 = vrcp.pop %v1959
        %v1968 = vmul.f32 %v1897, %v1960
        %v1969 = vmul.f32 %v1899, %v1961
        %v1970 = vmul.f32 %v1901, %v1962
        %v1971 = vmul.f32 %v1903, %v1963
        %v1972 = vmul.f32 %v1905, %v1964
        %v1973 = vmul.f32 %v1907, %v1965
        %v1974 = vmul.f32 %v1909, %v1966
        %v1975 = vmul.f32 %v1911, %v1967
        %v1976 = vsel %vm1735, %v1832, -inf
        %1977 = vmax.xlane.f32.xlu0 %v1976
        %v1978 = vpop.xlane.xlu0 %1977
        %v1979 = vsel %vm1735, %v1833, -inf
        %1980 = vmax.xlane.f32.xlu0 %v1979
        %v1981 = vpop.xlane.xlu0 %1980
        %v1982 = vsel %vm1735, %v1834, -inf
        %1983 = vmax.xlane.f32.xlu0 %v1982
        %v1984 = vpop.xlane.xlu0 %1983
        %v1985 = vsel %vm1735, %v1835, -inf
        %1986 = vmax.xlane.f32.xlu0 %v1985
        %v1987 = vpop.xlane.xlu0 %1986
        %v1988 = vsel %vm1735, %v1836, -inf
        %1989 = vmax.xlane.f32.xlu0 %v1988
        %v1990 = vpop.xlane.xlu0 %1989
        %v1991 = vsel %vm1735, %v1837, -inf
        %1992 = vmax.xlane.f32.xlu0 %v1991
        %v1993 = vpop.xlane.xlu0 %1992
        %v1994 = vsel %vm1735, %v1838, -inf
        %1995 = vmax.xlane.f32.xlu0 %v1994
        %v1996 = vpop.xlane.xlu0 %1995
        %v1997 = vsel %vm1735, %v1839, -inf
        %1998 = vmax.xlane.f32.xlu0 %v1997
        %v1999 = vpop.xlane.xlu0 %1998
        %v2000 = vsub.f32 %v1832, %v1978
        %v2001 = vsub.f32 %v1833, %v1981
        %v2002 = vsub.f32 %v1834, %v1984
        %v2003 = vsub.f32 %v1835, %v1987
        %v2004 = vsub.f32 %v1836, %v1990
        %v2005 = vsub.f32 %v1837, %v1993
        %v2006 = vsub.f32 %v1838, %v1996
        %v2007 = vsub.f32 %v1839, %v1999
        %v2008 = vmul.f32 %v2000, 1.442695
        %v2009 = vpow.pop %v2008
        %v2010 = vmul.f32 %v2001, 1.442695
        %v2011 = vpow.pop %v2010
        %v2012 = vmul.f32 %v2002, 1.442695
        %v2013 = vpow.pop %v2012
        %v2014 = vmul.f32 %v2003, 1.442695
        %v2015 = vpow.pop %v2014
        %v2016 = vmul.f32 %v2004, 1.442695
        %v2017 = vpow.pop %v2016
        %v2018 = vmul.f32 %v2005, 1.442695
        %v2019 = vpow.pop %v2018
        %v2020 = vmul.f32 %v2006, 1.442695
        %v2021 = vpow.pop %v2020
        %v2022 = vmul.f32 %v2007, 1.442695
        %v2023 = vpow.pop %v2022
        %v2024 = vsel %vm1735, %v2009, 0.0
        %2025 = vadd.xlane.f32.xlu0 %v2024
        %v2026 = vpop.xlane.xlu0 %2025
        %v2027 = vsel %vm1735, %v2011, 0.0
        %2028 = vadd.xlane.f32.xlu0 %v2027
        %v2029 = vpop.xlane.xlu0 %2028
        %v2030 = vsel %vm1735, %v2013, 0.0
        %2031 = vadd.xlane.f32.xlu0 %v2030
        %v2032 = vpop.xlane.xlu0 %2031
        %v2033 = vsel %vm1735, %v2015, 0.0
        %2034 = vadd.xlane.f32.xlu0 %v2033
        %v2035 = vpop.xlane.xlu0 %2034
        %v2036 = vsel %vm1735, %v2017, 0.0
        %2037 = vadd.xlane.f32.xlu0 %v2036
        %v2038 = vpop.xlane.xlu0 %2037
        %v2039 = vsel %vm1735, %v2019, 0.0
        %2040 = vadd.xlane.f32.xlu0 %v2039
        %v2041 = vpop.xlane.xlu0 %2040
        %v2042 = vsel %vm1735, %v2021, 0.0
        %2043 = vadd.xlane.f32.xlu0 %v2042
        %v2044 = vpop.xlane.xlu0 %2043
        %v2045 = vsel %vm1735, %v2023, 0.0
        %2046 = vadd.xlane.f32.xlu0 %v2045
        %v2047 = vpop.xlane.xlu0 %2046
        %v2048 = vrcp.pop %v2026
        %v2049 = vrcp.pop %v2029
        %v2050 = vrcp.pop %v2032
        %v2051 = vrcp.pop %v2035
        %v2052 = vrcp.pop %v2038
        %v2053 = vrcp.pop %v2041
        %v2054 = vrcp.pop %v2044
        %v2055 = vrcp.pop %v2047
        %v2056 = vmul.f32 %v2009, %v2048
        %v2057 = vmul.f32 %v2011, %v2049
        %v2058 = vmul.f32 %v2013, %v2050
        %v2059 = vmul.f32 %v2015, %v2051
        %v2060 = vmul.f32 %v2017, %v2052
        %v2061 = vmul.f32 %v2019, %v2053
        %v2062 = vmul.f32 %v2021, %v2054
        %v2063 = vmul.f32 %v2023, %v2055
        %v2064 = vmul.f32 %v1296, %v1968
        %v2065 = vmul.f32 %v1299, %v1969
        %v2066 = vmul.f32 %v1304, %v1970
        %v2067 = vmul.f32 %v1307, %v1971
        %v2068 = vmul.f32 %v1312, %v1972
        %v2069 = vmul.f32 %v1315, %v1973
        %v2070 = vmul.f32 %v1320, %v1974
        %v2071 = vmul.f32 %v1323, %v1975
        %v2072 = vpack.c.bf16 %v2064, %v2064
        %v2073 = vpack.c.bf16 %v2065, %v2065
        %v2074 = vpack.c.bf16 %v2066, %v2066
        %v2075 = vpack.c.bf16 %v2067, %v2067
        %v2076 = vpack.c.bf16 %v2068, %v2068
        %v2077 = vpack.c.bf16 %v2069, %v2069
        %v2078 = vpack.c.bf16 %v2070, %v2070
        %v2079 = vpack.c.bf16 %v2071, %v2071
        %v2081 = vpack.i.b16 %v403, %v403
        %v2083 = vlaneseq
        %v2084 = vshrl.u32 %v2083, 7
        %v2085 = vsub.s32 0, %v2084
        %v2086 = vrot.slane %v2081, %v2085
        %v2087 = vmul.bf16 %v2072, %v2086
        %v2088 = vmul.bf16 %v2073, %v2086
        %v2089 = vmul.bf16 %v2074, %v2086
        %v2090 = vmul.bf16 %v2075, %v2086
        %v2091 = vmul.bf16 %v2076, %v2086
        %v2092 = vmul.bf16 %v2077, %v2086
        %v2093 = vmul.bf16 %v2078, %v2086
        %v2094 = vmul.bf16 %v2079, %v2086
        %v2095 = vshrl.u32 %v403, 16
        %v2096 = vpack.i.b16 %v2095, %v2095
        %v2098 = vlaneseq
        %v2099 = vshrl.u32 %v2098, 7
        %v2100 = vsub.s32 0, %v2099
        %v2101 = vrot.slane %v2096, %v2100
        %v2102 = vmul.bf16 %v2072, %v2101
        %v2103 = vmul.bf16 %v2073, %v2101
        %v2104 = vmul.bf16 %v2074, %v2101
        %v2105 = vmul.bf16 %v2075, %v2101
        %v2106 = vmul.bf16 %v2076, %v2101
        %v2107 = vmul.bf16 %v2077, %v2101
        %v2108 = vmul.bf16 %v2078, %v2101
        %v2109 = vmul.bf16 %v2079, %v2101
        %v2118 = vrot.slane %v2102, 4
        %v2119 = vrot.slane %v2103, 4
        %v2120 = vrot.slane %v2104, 4
        %v2121 = vrot.slane %v2105, 4
        %v2122 = vrot.slane %v2106, 4
        %v2123 = vrot.slane %v2107, 4
        %v2124 = vrot.slane %v2108, 4
        %v2125 = vrot.slane %v2109, 4
        %vm2126 = vcmask 1043456
        %v2129 = vsel %vm2126, %v2087, %v2118
        %v2132 = vsel %vm2126, %v2088, %v2119
        %v2135 = vsel %vm2126, %v2089, %v2120
        %v2138 = vsel %vm2126, %v2090, %v2121
        %v2141 = vsel %vm2126, %v2091, %v2122
        %v2144 = vsel %vm2126, %v2092, %v2123
        %v2147 = vsel %vm2126, %v2093, %v2124
        %v2150 = vsel %vm2126, %v2094, %v2125
        %v2151 = vsel %vm1337, %v2129, 0
        %2153 = vmatprep.subr.bf16.mxu0 0
        %2154 = vmatpush1.bf16.xpose.msra.mxu0 %v1342
        %2155 = vmatprep.subr.bf16.mxu0 0
        %2156 = vmatpush1.bf16.xpose.msra.mxu0 0
        %2157 = vmatprep.subr.bf16.mxu0 0
        %2158 = vmatpush1.bf16.xpose.msra.mxu0 0
        %2159 = vmatprep.subr.bf16.mxu0 0
        %2160 = vmatpush1.bf16.xpose.msra.mxu0 0
        %2161 = vmatprep.subr.bf16.mxu0 0
        %2162 = vmatpush1.bf16.xpose.msra.mxu0 0
        %2163 = vmatprep.subr.bf16.mxu0 0
        %2164 = vmatpush1.bf16.xpose.msra.mxu0 0
        %2165 = vmatprep.subr.bf16.mxu0 0
        %2166 = vmatpush1.bf16.xpose.msra.mxu0 0
        %2167 = vmatprep.subr.bf16.mxu0 0
        %2168 = vmatpush1.bf16.xpose.msra.mxu0 0
        %2169 = vmatprep.subr.bf16.mxu0 0
        %2170 = vmatpush1.bf16.xpose.msra.mxu0 0
        %2171 = vmatprep.subr.bf16.mxu0 0
        %2172 = vmatpush1.bf16.xpose.msra.mxu0 0
        %2173 = vmatprep.subr.bf16.mxu0 0
        %2174 = vmatpush1.bf16.xpose.msra.mxu0 0
        %2175 = vmatprep.subr.bf16.mxu0 0
        %2176 = vmatpush1.bf16.xpose.msra.mxu0 0
        %2177 = vmatprep.subr.bf16.mxu0 0
        %2178 = vmatpush1.bf16.xpose.msra.mxu0 0
        %2179 = vmatprep.subr.bf16.mxu0 0
        %2180 = vmatpush1.bf16.xpose.msra.mxu0 0
        %2181 = vmatprep.subr.bf16.mxu0 0
        %2182 = vmatpush1.bf16.xpose.msra.mxu0 0
        %2183 = vmatprep.subr.bf16.mxu0 0
        %2184 = vmatpush1.bf16.xpose.msra.mxu0 0
        %2185 = vmatprep.mubr.bf16.mxu0 0
        %2186 = vmatmul.mubr.bf16.gmra.mrb[0].mxu0 %v2151
        %v2187 = vpop.f32.mrb[0].mxu0
        %v2188 = vadd.f32 0.0, %v2187
        %v2189 = vpop.f32.mrb[0].mxu0
        %v2190 = vpop.f32.mrb[0].mxu0
        %v2191 = vadd.f32 0.0, %v2190
        %v2192 = vpop.f32.mrb[0].mxu0
        %2193 = vdwg.mxu0
        %v2194 = vsel %vm1337, %v2132, 0
        %2196 = vmatprep.subr.bf16.mxu0 0
        %2197 = vmatpush1.bf16.xpose.msra.mxu0 %v1391
        %2198 = vmatprep.subr.bf16.mxu0 0
        %2199 = vmatpush1.bf16.xpose.msra.mxu0 0
        %2200 = vmatprep.subr.bf16.mxu0 0
        %2201 = vmatpush1.bf16.xpose.msra.mxu0 0
        %2202 = vmatprep.subr.bf16.mxu0 0
        %2203 = vmatpush1.bf16.xpose.msra.mxu0 0
        %2204 = vmatprep.subr.bf16.mxu0 0
        %2205 = vmatpush1.bf16.xpose.msra.mxu0 0
        %2206 = vmatprep.subr.bf16.mxu0 0
        %2207 = vmatpush1.bf16.xpose.msra.mxu0 0
        %2208 = vmatprep.subr.bf16.mxu0 0
        %2209 = vmatpush1.bf16.xpose.msra.mxu0 0
        %2210 = vmatprep.subr.bf16.mxu0 0
        %2211 = vmatpush1.bf16.xpose.msra.mxu0 0
        %2212 = vmatprep.subr.bf16.mxu0 0
        %2213 = vmatpush1.bf16.xpose.msra.mxu0 0
        %2214 = vmatprep.subr.bf16.mxu0 0
        %2215 = vmatpush1.bf16.xpose.msra.mxu0 0
        %2216 = vmatprep.subr.bf16.mxu0 0
        %2217 = vmatpush1.bf16.xpose.msra.mxu0 0
        %2218 = vmatprep.subr.bf16.mxu0 0
        %2219 = vmatpush1.bf16.xpose.msra.mxu0 0
        %2220 = vmatprep.subr.bf16.mxu0 0
        %2221 = vmatpush1.bf16.xpose.msra.mxu0 0
        %2222 = vmatprep.subr.bf16.mxu0 0
        %2223 = vmatpush1.bf16.xpose.msra.mxu0 0
        %2224 = vmatprep.subr.bf16.mxu0 0
        %2225 = vmatpush1.bf16.xpose.msra.mxu0 0
        %2226 = vmatprep.subr.bf16.mxu0 0
        %2227 = vmatpush1.bf16.xpose.msra.mxu0 0
        %2228 = vmatprep.mubr.bf16.mxu0 0
        %2229 = vmatmul.mubr.bf16.gmra.mrb[0].mxu0 %v2194
        %v2230 = vpop.f32.mrb[0].mxu0
        %v2231 = vadd.f32 0.0, %v2230
        %v2232 = vpop.f32.mrb[0].mxu0
        %v2233 = vpop.f32.mrb[0].mxu0
        %v2234 = vadd.f32 0.0, %v2233
        %v2235 = vpop.f32.mrb[0].mxu0
        %2236 = vdwg.mxu0
        %v2237 = vsel %vm1337, %v2135, 0
        %2239 = vmatprep.subr.bf16.mxu0 0
        %2240 = vmatpush1.bf16.xpose.msra.mxu0 %v1440
        %2241 = vmatprep.subr.bf16.mxu0 0
        %2242 = vmatpush1.bf16.xpose.msra.mxu0 0
        %2243 = vmatprep.subr.bf16.mxu0 0
        %2244 = vmatpush1.bf16.xpose.msra.mxu0 0
        %2245 = vmatprep.subr.bf16.mxu0 0
        %2246 = vmatpush1.bf16.xpose.msra.mxu0 0
        %2247 = vmatprep.subr.bf16.mxu0 0
        %2248 = vmatpush1.bf16.xpose.msra.mxu0 0
        %2249 = vmatprep.subr.bf16.mxu0 0
        %2250 = vmatpush1.bf16.xpose.msra.mxu0 0
        %2251 = vmatprep.subr.bf16.mxu0 0
        %2252 = vmatpush1.bf16.xpose.msra.mxu0 0
        %2253 = vmatprep.subr.bf16.mxu0 0
        %2254 = vmatpush1.bf16.xpose.msra.mxu0 0
        %2255 = vmatprep.subr.bf16.mxu0 0
        %2256 = vmatpush1.bf16.xpose.msra.mxu0 0
        %2257 = vmatprep.subr.bf16.mxu0 0
        %2258 = vmatpush1.bf16.xpose.msra.mxu0 0
        %2259 = vmatprep.subr.bf16.mxu0 0
        %2260 = vmatpush1.bf16.xpose.msra.mxu0 0
        %2261 = vmatprep.subr.bf16.mxu0 0
        %2262 = vmatpush1.bf16.xpose.msra.mxu0 0
        %2263 = vmatprep.subr.bf16.mxu0 0
        %2264 = vmatpush1.bf16.xpose.msra.mxu0 0
        %2265 = vmatprep.subr.bf16.mxu0 0
        %2266 = vmatpush1.bf16.xpose.msra.mxu0 0
        %2267 = vmatprep.subr.bf16.mxu0 0
        %2268 = vmatpush1.bf16.xpose.msra.mxu0 0
        %2269 = vmatprep.subr.bf16.mxu0 0
        %2270 = vmatpush1.bf16.xpose.msra.mxu0 0
        %2271 = vmatprep.mubr.bf16.mxu0 0
        %2272 = vmatmul.mubr.bf16.gmra.mrb[0].mxu0 %v2237
        %v2273 = vpop.f32.mrb[0].mxu0
        %v2274 = vadd.f32 0.0, %v2273
        %v2275 = vpop.f32.mrb[0].mxu0
        %v2276 = vpop.f32.mrb[0].mxu0
        %v2277 = vadd.f32 0.0, %v2276
        %v2278 = vpop.f32.mrb[0].mxu0
        %2279 = vdwg.mxu0
        %v2280 = vsel %vm1337, %v2138, 0
        %2282 = vmatprep.subr.bf16.mxu0 0
        %2283 = vmatpush1.bf16.xpose.msra.mxu0 %v1489
        %2284 = vmatprep.subr.bf16.mxu0 0
        %2285 = vmatpush1.bf16.xpose.msra.mxu0 0
        %2286 = vmatprep.subr.bf16.mxu0 0
        %2287 = vmatpush1.bf16.xpose.msra.mxu0 0
        %2288 = vmatprep.subr.bf16.mxu0 0
        %2289 = vmatpush1.bf16.xpose.msra.mxu0 0
        %2290 = vmatprep.subr.bf16.mxu0 0
        %2291 = vmatpush1.bf16.xpose.msra.mxu0 0
        %2292 = vmatprep.subr.bf16.mxu0 0
        %2293 = vmatpush1.bf16.xpose.msra.mxu0 0
        %2294 = vmatprep.subr.bf16.mxu0 0
        %2295 = vmatpush1.bf16.xpose.msra.mxu0 0
        %2296 = vmatprep.subr.bf16.mxu0 0
        %2297 = vmatpush1.bf16.xpose.msra.mxu0 0
        %2298 = vmatprep.subr.bf16.mxu0 0
        %2299 = vmatpush1.bf16.xpose.msra.mxu0 0
        %2300 = vmatprep.subr.bf16.mxu0 0
        %2301 = vmatpush1.bf16.xpose.msra.mxu0 0
        %2302 = vmatprep.subr.bf16.mxu0 0
        %2303 = vmatpush1.bf16.xpose.msra.mxu0 0
        %2304 = vmatprep.subr.bf16.mxu0 0
        %2305 = vmatpush1.bf16.xpose.msra.mxu0 0
        %2306 = vmatprep.subr.bf16.mxu0 0
        %2307 = vmatpush1.bf16.xpose.msra.mxu0 0
        %2308 = vmatprep.subr.bf16.mxu0 0
        %2309 = vmatpush1.bf16.xpose.msra.mxu0 0
        %2310 = vmatprep.subr.bf16.mxu0 0
        %2311 = vmatpush1.bf16.xpose.msra.mxu0 0
        %2312 = vmatprep.subr.bf16.mxu0 0
        %2313 = vmatpush1.bf16.xpose.msra.mxu0 0
        %2314 = vmatprep.mubr.bf16.mxu0 0
        %2315 = vmatmul.mubr.bf16.gmra.mrb[0].mxu0 %v2280
        %v2316 = vpop.f32.mrb[0].mxu0
        %v2317 = vadd.f32 0.0, %v2316
        %v2318 = vpop.f32.mrb[0].mxu0
        %v2319 = vpop.f32.mrb[0].mxu0
        %v2320 = vadd.f32 0.0, %v2319
        %v2321 = vpop.f32.mrb[0].mxu0
        %2322 = vdwg.mxu0
        %v2323 = vsel %vm1337, %v2141, 0
        %2325 = vmatprep.subr.bf16.mxu0 0
        %2326 = vmatpush1.bf16.xpose.msra.mxu0 %v1538
        %2327 = vmatprep.subr.bf16.mxu0 0
        %2328 = vmatpush1.bf16.xpose.msra.mxu0 0
        %2329 = vmatprep.subr.bf16.mxu0 0
        %2330 = vmatpush1.bf16.xpose.msra.mxu0 0
        %2331 = vmatprep.subr.bf16.mxu0 0
        %2332 = vmatpush1.bf16.xpose.msra.mxu0 0
        %2333 = vmatprep.subr.bf16.mxu0 0
        %2334 = vmatpush1.bf16.xpose.msra.mxu0 0
        %2335 = vmatprep.subr.bf16.mxu0 0
        %2336 = vmatpush1.bf16.xpose.msra.mxu0 0
        %2337 = vmatprep.subr.bf16.mxu0 0
        %2338 = vmatpush1.bf16.xpose.msra.mxu0 0
        %2339 = vmatprep.subr.bf16.mxu0 0
        %2340 = vmatpush1.bf16.xpose.msra.mxu0 0
        %2341 = vmatprep.subr.bf16.mxu0 0
        %2342 = vmatpush1.bf16.xpose.msra.mxu0 0
        %2343 = vmatprep.subr.bf16.mxu0 0
        %2344 = vmatpush1.bf16.xpose.msra.mxu0 0
        %2345 = vmatprep.subr.bf16.mxu0 0
        %2346 = vmatpush1.bf16.xpose.msra.mxu0 0
        %2347 = vmatprep.subr.bf16.mxu0 0
        %2348 = vmatpush1.bf16.xpose.msra.mxu0 0
        %2349 = vmatprep.subr.bf16.mxu0 0
        %2350 = vmatpush1.bf16.xpose.msra.mxu0 0
        %2351 = vmatprep.subr.bf16.mxu0 0
        %2352 = vmatpush1.bf16.xpose.msra.mxu0 0
        %2353 = vmatprep.subr.bf16.mxu0 0
        %2354 = vmatpush1.bf16.xpose.msra.mxu0 0
        %2355 = vmatprep.subr.bf16.mxu0 0
        %2356 = vmatpush1.bf16.xpose.msra.mxu0 0
        %2357 = vmatprep.mubr.bf16.mxu0 0
        %2358 = vmatmul.mubr.bf16.gmra.mrb[0].mxu0 %v2323
        %v2359 = vpop.f32.mrb[0].mxu0
        %v2360 = vadd.f32 0.0, %v2359
        %v2361 = vpop.f32.mrb[0].mxu0
        %v2362 = vpop.f32.mrb[0].mxu0
        %v2363 = vadd.f32 0.0, %v2362
        %v2364 = vpop.f32.mrb[0].mxu0
        %2365 = vdwg.mxu0
        %v2366 = vsel %vm1337, %v2144, 0
        %2368 = vmatprep.subr.bf16.mxu0 0
        %2369 = vmatpush1.bf16.xpose.msra.mxu0 %v1587
        %2370 = vmatprep.subr.bf16.mxu0 0
        %2371 = vmatpush1.bf16.xpose.msra.mxu0 0
        %2372 = vmatprep.subr.bf16.mxu0 0
        %2373 = vmatpush1.bf16.xpose.msra.mxu0 0
        %2374 = vmatprep.subr.bf16.mxu0 0
        %2375 = vmatpush1.bf16.xpose.msra.mxu0 0
        %2376 = vmatprep.subr.bf16.mxu0 0
        %2377 = vmatpush1.bf16.xpose.msra.mxu0 0
        %2378 = vmatprep.subr.bf16.mxu0 0
        %2379 = vmatpush1.bf16.xpose.msra.mxu0 0
        %2380 = vmatprep.subr.bf16.mxu0 0
        %2381 = vmatpush1.bf16.xpose.msra.mxu0 0
        %2382 = vmatprep.subr.bf16.mxu0 0
        %2383 = vmatpush1.bf16.xpose.msra.mxu0 0
        %2384 = vmatprep.subr.bf16.mxu0 0
        %2385 = vmatpush1.bf16.xpose.msra.mxu0 0
        %2386 = vmatprep.subr.bf16.mxu0 0
        %2387 = vmatpush1.bf16.xpose.msra.mxu0 0
        %2388 = vmatprep.subr.bf16.mxu0 0
        %2389 = vmatpush1.bf16.xpose.msra.mxu0 0
        %2390 = vmatprep.subr.bf16.mxu0 0
        %2391 = vmatpush1.bf16.xpose.msra.mxu0 0
        %2392 = vmatprep.subr.bf16.mxu0 0
        %2393 = vmatpush1.bf16.xpose.msra.mxu0 0
        %2394 = vmatprep.subr.bf16.mxu0 0
        %2395 = vmatpush1.bf16.xpose.msra.mxu0 0
        %2396 = vmatprep.subr.bf16.mxu0 0
        %2397 = vmatpush1.bf16.xpose.msra.mxu0 0
        %2398 = vmatprep.subr.bf16.mxu0 0
        %2399 = vmatpush1.bf16.xpose.msra.mxu0 0
        %2400 = vmatprep.mubr.bf16.mxu0 0
        %2401 = vmatmul.mubr.bf16.gmra.mrb[0].mxu0 %v2366
        %v2402 = vpop.f32.mrb[0].mxu0
        %v2403 = vadd.f32 0.0, %v2402
        %v2404 = vpop.f32.mrb[0].mxu0
        %v2405 = vpop.f32.mrb[0].mxu0
        %v2406 = vadd.f32 0.0, %v2405
        %v2407 = vpop.f32.mrb[0].mxu0
        %2408 = vdwg.mxu0
        %v2409 = vsel %vm1337, %v2147, 0
        %2411 = vmatprep.subr.bf16.mxu0 0
        %2412 = vmatpush1.bf16.xpose.msra.mxu0 %v1636
        %2413 = vmatprep.subr.bf16.mxu0 0
        %2414 = vmatpush1.bf16.xpose.msra.mxu0 0
        %2415 = vmatprep.subr.bf16.mxu0 0
        %2416 = vmatpush1.bf16.xpose.msra.mxu0 0
        %2417 = vmatprep.subr.bf16.mxu0 0
        %2418 = vmatpush1.bf16.xpose.msra.mxu0 0
        %2419 = vmatprep.subr.bf16.mxu0 0
        %2420 = vmatpush1.bf16.xpose.msra.mxu0 0
        %2421 = vmatprep.subr.bf16.mxu0 0
        %2422 = vmatpush1.bf16.xpose.msra.mxu0 0
        %2423 = vmatprep.subr.bf16.mxu0 0
        %2424 = vmatpush1.bf16.xpose.msra.mxu0 0
        %2425 = vmatprep.subr.bf16.mxu0 0
        %2426 = vmatpush1.bf16.xpose.msra.mxu0 0
        %2427 = vmatprep.subr.bf16.mxu0 0
        %2428 = vmatpush1.bf16.xpose.msra.mxu0 0
        %2429 = vmatprep.subr.bf16.mxu0 0
        %2430 = vmatpush1.bf16.xpose.msra.mxu0 0
        %2431 = vmatprep.subr.bf16.mxu0 0
        %2432 = vmatpush1.bf16.xpose.msra.mxu0 0
        %2433 = vmatprep.subr.bf16.mxu0 0
        %2434 = vmatpush1.bf16.xpose.msra.mxu0 0
        %2435 = vmatprep.subr.bf16.mxu0 0
        %2436 = vmatpush1.bf16.xpose.msra.mxu0 0
        %2437 = vmatprep.subr.bf16.mxu0 0
        %2438 = vmatpush1.bf16.xpose.msra.mxu0 0
        %2439 = vmatprep.subr.bf16.mxu0 0
        %2440 = vmatpush1.bf16.xpose.msra.mxu0 0
        %2441 = vmatprep.subr.bf16.mxu0 0
        %2442 = vmatpush1.bf16.xpose.msra.mxu0 0
        %2443 = vmatprep.mubr.bf16.mxu0 0
        %2444 = vmatmul.mubr.bf16.gmra.mrb[0].mxu0 %v2409
        %v2445 = vpop.f32.mrb[0].mxu0
        %v2446 = vadd.f32 0.0, %v2445
        %v2447 = vpop.f32.mrb[0].mxu0
        %v2448 = vpop.f32.mrb[0].mxu0
        %v2449 = vadd.f32 0.0, %v2448
        %v2450 = vpop.f32.mrb[0].mxu0
        %2451 = vdwg.mxu0
        %v2452 = vsel %vm1337, %v2150, 0
        %2454 = vmatprep.subr.bf16.mxu0 0
        %2455 = vmatpush1.bf16.xpose.msra.mxu0 %v1685
        %2456 = vmatprep.subr.bf16.mxu0 0
        %2457 = vmatpush1.bf16.xpose.msra.mxu0 0
        %2458 = vmatprep.subr.bf16.mxu0 0
        %2459 = vmatpush1.bf16.xpose.msra.mxu0 0
        %2460 = vmatprep.subr.bf16.mxu0 0
        %2461 = vmatpush1.bf16.xpose.msra.mxu0 0
        %2462 = vmatprep.subr.bf16.mxu0 0
        %2463 = vmatpush1.bf16.xpose.msra.mxu0 0
        %2464 = vmatprep.subr.bf16.mxu0 0
        %2465 = vmatpush1.bf16.xpose.msra.mxu0 0
        %2466 = vmatprep.subr.bf16.mxu0 0
        %2467 = vmatpush1.bf16.xpose.msra.mxu0 0
        %2468 = vmatprep.subr.bf16.mxu0 0
        %2469 = vmatpush1.bf16.xpose.msra.mxu0 0
        %2470 = vmatprep.subr.bf16.mxu0 0
        %2471 = vmatpush1.bf16.xpose.msra.mxu0 0
        %2472 = vmatprep.subr.bf16.mxu0 0
        %2473 = vmatpush1.bf16.xpose.msra.mxu0 0
        %2474 = vmatprep.subr.bf16.mxu0 0
        %2475 = vmatpush1.bf16.xpose.msra.mxu0 0
        %2476 = vmatprep.subr.bf16.mxu0 0
        %2477 = vmatpush1.bf16.xpose.msra.mxu0 0
        %2478 = vmatprep.subr.bf16.mxu0 0
        %2479 = vmatpush1.bf16.xpose.msra.mxu0 0
        %2480 = vmatprep.subr.bf16.mxu0 0
        %2481 = vmatpush1.bf16.xpose.msra.mxu0 0
        %2482 = vmatprep.subr.bf16.mxu0 0
        %2483 = vmatpush1.bf16.xpose.msra.mxu0 0
        %2484 = vmatprep.subr.bf16.mxu0 0
        %2485 = vmatpush1.bf16.xpose.msra.mxu0 0
        %2486 = vmatprep.mubr.bf16.mxu0 0
        %2487 = vmatmul.mubr.bf16.gmra.mrb[0].mxu0 %v2452
        %v2488 = vpop.f32.mrb[0].mxu0
        %v2489 = vadd.f32 0.0, %v2488
        %v2490 = vpop.f32.mrb[0].mxu0
        %v2491 = vpop.f32.mrb[0].mxu0
        %v2492 = vadd.f32 0.0, %v2491
        %v2493 = vpop.f32.mrb[0].mxu0
        %2494 = vdwg.mxu0
        %v2495 = vmul.f32 %v2188, %v2056
        %v2496 = vmul.f32 %v2191, %v2056
        %v2497 = vmul.f32 %v2231, %v2057
        %v2498 = vmul.f32 %v2234, %v2057
        %v2499 = vmul.f32 %v2274, %v2058
        %v2500 = vmul.f32 %v2277, %v2058
        %v2501 = vmul.f32 %v2317, %v2059
        %v2502 = vmul.f32 %v2320, %v2059
        %v2503 = vmul.f32 %v2360, %v2060
        %v2504 = vmul.f32 %v2363, %v2060
        %v2505 = vmul.f32 %v2403, %v2061
        %v2506 = vmul.f32 %v2406, %v2061
        %v2507 = vmul.f32 %v2446, %v2062
        %v2508 = vmul.f32 %v2449, %v2062
        %v2509 = vmul.f32 %v2489, %v2063
        %v2510 = vmul.f32 %v2492, %v2063
        %v2511 = vcombine.low %v2495, %v2499
        %v2512 = vcombine.high %v2495, %v2499
        %v2514 = vunpack.c.l.s4 1983009808
        %v2515 = vunpack.c.0.s8 %v2514
        %v2516 = vlaneseq
        %v2517 = vshrl.u32 %v2516, 7
        %v2518 = vsub.s32 %v2515, %v2517
        %v2519 = vrot.slane %v2511, %v2518
        %v2521 = vunpack.c.l.s4 1983009808
        %v2522 = vunpack.c.0.s8 %v2521
        %v2523 = vlaneseq
        %v2524 = vshrl.u32 %v2523, 7
        %v2525 = vsub.s32 %v2522, %v2524
        %v2526 = vrot.slane %v2512, %v2525
        %v2527 = vcombine.low %v2497, %v2501
        %v2528 = vcombine.high %v2497, %v2501
        %v2530 = vunpack.c.l.s4 1983009808
        %v2531 = vunpack.c.0.s8 %v2530
        %v2532 = vlaneseq
        %v2533 = vshrl.u32 %v2532, 7
        %v2534 = vsub.s32 %v2531, %v2533
        %v2535 = vrot.slane %v2527, %v2534
        %v2537 = vunpack.c.l.s4 1983009808
        %v2538 = vunpack.c.0.s8 %v2537
        %v2539 = vlaneseq
        %v2540 = vshrl.u32 %v2539, 7
        %v2541 = vsub.s32 %v2538, %v2540
        %v2542 = vrot.slane %v2528, %v2541
        %v2543 = vcombine.low %v2503, %v2507
        %v2544 = vcombine.high %v2503, %v2507
        %v2546 = vunpack.c.l.s4 1983009808
        %v2547 = vunpack.c.0.s8 %v2546
        %v2548 = vlaneseq
        %v2549 = vshrl.u32 %v2548, 7
        %v2550 = vsub.s32 %v2547, %v2549
        %v2551 = vrot.slane %v2543, %v2550
        %v2553 = vunpack.c.l.s4 1983009808
        %v2554 = vunpack.c.0.s8 %v2553
        %v2555 = vlaneseq
        %v2556 = vshrl.u32 %v2555, 7
        %v2557 = vsub.s32 %v2554, %v2556
        %v2558 = vrot.slane %v2544, %v2557
        %v2559 = vcombine.low %v2505, %v2509
        %v2560 = vcombine.high %v2505, %v2509
        %v2562 = vunpack.c.l.s4 1983009808
        %v2563 = vunpack.c.0.s8 %v2562
        %v2564 = vlaneseq
        %v2565 = vshrl.u32 %v2564, 7
        %v2566 = vsub.s32 %v2563, %v2565
        %v2567 = vrot.slane %v2559, %v2566
        %v2569 = vunpack.c.l.s4 1983009808
        %v2570 = vunpack.c.0.s8 %v2569
        %v2571 = vlaneseq
        %v2572 = vshrl.u32 %v2571, 7
        %v2573 = vsub.s32 %v2570, %v2572
        %v2574 = vrot.slane %v2560, %v2573
        %v2575 = vcombine.low %v2519, %v2535
        %v2576 = vcombine.high %v2519, %v2535
        %v2578 = vunpack.c.l.s4 1934713408
        %v2579 = vunpack.c.0.s8 %v2578
        %v2580 = vlaneseq
        %v2581 = vshrl.u32 %v2580, 7
        %v2582 = vsub.s32 %v2579, %v2581
        %v2583 = vrot.slane %v2575, %v2582
        %v2585 = vunpack.c.l.s4 1934713408
        %v2586 = vunpack.c.0.s8 %v2585
        %v2587 = vlaneseq
        %v2588 = vshrl.u32 %v2587, 7
        %v2589 = vsub.s32 %v2586, %v2588
        %v2590 = vrot.slane %v2576, %v2589
        %v2591 = vcombine.low %v2526, %v2542
        %v2592 = vcombine.high %v2526, %v2542
        %v2594 = vunpack.c.l.s4 1934713408
        %v2595 = vunpack.c.0.s8 %v2594
        %v2596 = vlaneseq
        %v2597 = vshrl.u32 %v2596, 7
        %v2598 = vsub.s32 %v2595, %v2597
        %v2599 = vrot.slane %v2591, %v2598
        %v2601 = vunpack.c.l.s4 1934713408
        %v2602 = vunpack.c.0.s8 %v2601
        %v2603 = vlaneseq
        %v2604 = vshrl.u32 %v2603, 7
        %v2605 = vsub.s32 %v2602, %v2604
        %v2606 = vrot.slane %v2592, %v2605
        %v2607 = vcombine.low %v2551, %v2567
        %v2608 = vcombine.high %v2551, %v2567
        %v2610 = vunpack.c.l.s4 1934713408
        %v2611 = vunpack.c.0.s8 %v2610
        %v2612 = vlaneseq
        %v2613 = vshrl.u32 %v2612, 7
        %v2614 = vsub.s32 %v2611, %v2613
        %v2615 = vrot.slane %v2607, %v2614
        %v2617 = vunpack.c.l.s4 1934713408
        %v2618 = vunpack.c.0.s8 %v2617
        %v2619 = vlaneseq
        %v2620 = vshrl.u32 %v2619, 7
        %v2621 = vsub.s32 %v2618, %v2620
        %v2622 = vrot.slane %v2608, %v2621
        %v2623 = vcombine.low %v2558, %v2574
        %v2624 = vcombine.high %v2558, %v2574
        %v2626 = vunpack.c.l.s4 1934713408
        %v2627 = vunpack.c.0.s8 %v2626
        %v2628 = vlaneseq
        %v2629 = vshrl.u32 %v2628, 7
        %v2630 = vsub.s32 %v2627, %v2629
        %v2631 = vrot.slane %v2623, %v2630
        %v2633 = vunpack.c.l.s4 1934713408
        %v2634 = vunpack.c.0.s8 %v2633
        %v2635 = vlaneseq
        %v2636 = vshrl.u32 %v2635, 7
        %v2637 = vsub.s32 %v2634, %v2636
        %v2638 = vrot.slane %v2624, %v2637
        %v2639 = vcombine.low %v2583, %v2615
        %v2640 = vcombine.high %v2583, %v2615
        %v2641 = vcombine.low %v2590, %v2622
        %v2642 = vcombine.high %v2590, %v2622
        %v2643 = vcombine.low %v2599, %v2631
        %v2644 = vcombine.high %v2599, %v2631
        %v2645 = vcombine.low %v2606, %v2638
        %v2646 = vcombine.high %v2606, %v2638
        %v2647 = vcombine.low %v2496, %v2500
        %v2648 = vcombine.high %v2496, %v2500
        %v2650 = vunpack.c.l.s4 1983009808
        %v2651 = vunpack.c.0.s8 %v2650
        %v2652 = vlaneseq
        %v2653 = vshrl.u32 %v2652, 7
        %v2654 = vsub.s32 %v2651, %v2653
        %v2655 = vrot.slane %v2647, %v2654
        %v2657 = vunpack.c.l.s4 1983009808
        %v2658 = vunpack.c.0.s8 %v2657
        %v2659 = vlaneseq
        %v2660 = vshrl.u32 %v2659, 7
        %v2661 = vsub.s32 %v2658, %v2660
        %v2662 = vrot.slane %v2648, %v2661
        %v2663 = vcombine.low %v2498, %v2502
        %v2664 = vcombine.high %v2498, %v2502
        %v2666 = vunpack.c.l.s4 1983009808
        %v2667 = vunpack.c.0.s8 %v2666
        %v2668 = vlaneseq
        %v2669 = vshrl.u32 %v2668, 7
        %v2670 = vsub.s32 %v2667, %v2669
        %v2671 = vrot.slane %v2663, %v2670
        %v2673 = vunpack.c.l.s4 1983009808
        %v2674 = vunpack.c.0.s8 %v2673
        %v2675 = vlaneseq
        %v2676 = vshrl.u32 %v2675, 7
        %v2677 = vsub.s32 %v2674, %v2676
        %v2678 = vrot.slane %v2664, %v2677
        %v2679 = vcombine.low %v2504, %v2508
        %v2680 = vcombine.high %v2504, %v2508
        %v2682 = vunpack.c.l.s4 1983009808
        %v2683 = vunpack.c.0.s8 %v2682
        %v2684 = vlaneseq
        %v2685 = vshrl.u32 %v2684, 7
        %v2686 = vsub.s32 %v2683, %v2685
        %v2687 = vrot.slane %v2679, %v2686
        %v2689 = vunpack.c.l.s4 1983009808
        %v2690 = vunpack.c.0.s8 %v2689
        %v2691 = vlaneseq
        %v2692 = vshrl.u32 %v2691, 7
        %v2693 = vsub.s32 %v2690, %v2692
        %v2694 = vrot.slane %v2680, %v2693
        %v2695 = vcombine.low %v2506, %v2510
        %v2696 = vcombine.high %v2506, %v2510
        %v2698 = vunpack.c.l.s4 1983009808
        %v2699 = vunpack.c.0.s8 %v2698
        %v2700 = vlaneseq
        %v2701 = vshrl.u32 %v2700, 7
        %v2702 = vsub.s32 %v2699, %v2701
        %v2703 = vrot.slane %v2695, %v2702
        %v2705 = vunpack.c.l.s4 1983009808
        %v2706 = vunpack.c.0.s8 %v2705
        %v2707 = vlaneseq
        %v2708 = vshrl.u32 %v2707, 7
        %v2709 = vsub.s32 %v2706, %v2708
        %v2710 = vrot.slane %v2696, %v2709
        %v2711 = vcombine.low %v2655, %v2671
        %v2712 = vcombine.high %v2655, %v2671
        %v2714 = vunpack.c.l.s4 1934713408
        %v2715 = vunpack.c.0.s8 %v2714
        %v2716 = vlaneseq
        %v2717 = vshrl.u32 %v2716, 7
        %v2718 = vsub.s32 %v2715, %v2717
        %v2719 = vrot.slane %v2711, %v2718
        %v2721 = vunpack.c.l.s4 1934713408
        %v2722 = vunpack.c.0.s8 %v2721
        %v2723 = vlaneseq
        %v2724 = vshrl.u32 %v2723, 7
        %v2725 = vsub.s32 %v2722, %v2724
        %v2726 = vrot.slane %v2712, %v2725
        %v2727 = vcombine.low %v2662, %v2678
        %v2728 = vcombine.high %v2662, %v2678
        %v2730 = vunpack.c.l.s4 1934713408
        %v2731 = vunpack.c.0.s8 %v2730
        %v2732 = vlaneseq
        %v2733 = vshrl.u32 %v2732, 7
        %v2734 = vsub.s32 %v2731, %v2733
        %v2735 = vrot.slane %v2727, %v2734
        %v2737 = vunpack.c.l.s4 1934713408
        %v2738 = vunpack.c.0.s8 %v2737
        %v2739 = vlaneseq
        %v2740 = vshrl.u32 %v2739, 7
        %v2741 = vsub.s32 %v2738, %v2740
        %v2742 = vrot.slane %v2728, %v2741
        %v2743 = vcombine.low %v2687, %v2703
        %v2744 = vcombine.high %v2687, %v2703
        %v2746 = vunpack.c.l.s4 1934713408
        %v2747 = vunpack.c.0.s8 %v2746
        %v2748 = vlaneseq
        %v2749 = vshrl.u32 %v2748, 7
        %v2750 = vsub.s32 %v2747, %v2749
        %v2751 = vrot.slane %v2743, %v2750
        %v2753 = vunpack.c.l.s4 1934713408
        %v2754 = vunpack.c.0.s8 %v2753
        %v2755 = vlaneseq
        %v2756 = vshrl.u32 %v2755, 7
        %v2757 = vsub.s32 %v2754, %v2756
        %v2758 = vrot.slane %v2744, %v2757
        %v2759 = vcombine.low %v2694, %v2710
        %v2760 = vcombine.high %v2694, %v2710
        %v2762 = vunpack.c.l.s4 1934713408
        %v2763 = vunpack.c.0.s8 %v2762
        %v2764 = vlaneseq
        %v2765 = vshrl.u32 %v2764, 7
        %v2766 = vsub.s32 %v2763, %v2765
        %v2767 = vrot.slane %v2759, %v2766
        %v2769 = vunpack.c.l.s4 1934713408
        %v2770 = vunpack.c.0.s8 %v2769
        %v2771 = vlaneseq
        %v2772 = vshrl.u32 %v2771, 7
        %v2773 = vsub.s32 %v2770, %v2772
        %v2774 = vrot.slane %v2760, %v2773
        %v2775 = vcombine.low %v2719, %v2751
        %v2776 = vcombine.high %v2719, %v2751
        %v2777 = vcombine.low %v2726, %v2758
        %v2778 = vcombine.high %v2726, %v2758
        %v2779 = vcombine.low %v2735, %v2767
        %v2780 = vcombine.high %v2735, %v2767
        %v2781 = vcombine.low %v2742, %v2774
        %v2782 = vcombine.high %v2742, %v2774
        %2784 = vrot.lane.b32.xlu0 %v2640, 8
        %v2785 = vpop.permute.xlu0 %2784
        %2788 = vrot.lane.b32.xlu0 %v2641, 16
        %v2789 = vpop.permute.xlu0 %2788
        %2792 = vrot.lane.b32.xlu0 %v2642, 24
        %v2793 = vpop.permute.xlu0 %2792
        %2796 = vrot.lane.b32.xlu0 %v2643, 32
        %v2797 = vpop.permute.xlu0 %2796
        %2800 = vrot.lane.b32.xlu0 %v2644, 40
        %v2801 = vpop.permute.xlu0 %2800
        %2804 = vrot.lane.b32.xlu0 %v2645, 48
        %v2805 = vpop.permute.xlu0 %2804
        %2808 = vrot.lane.b32.xlu0 %v2646, 56
        %v2809 = vpop.permute.xlu0 %2808
        %2812 = vrot.lane.b32.xlu0 %v2775, 64
        %v2813 = vpop.permute.xlu0 %2812
        %2816 = vrot.lane.b32.xlu0 %v2776, 72
        %v2817 = vpop.permute.xlu0 %2816
        %2820 = vrot.lane.b32.xlu0 %v2777, 80
        %v2821 = vpop.permute.xlu0 %2820
        %2824 = vrot.lane.b32.xlu0 %v2778, 88
        %v2825 = vpop.permute.xlu0 %2824
        %2828 = vrot.lane.b32.xlu0 %v2779, 96
        %v2829 = vpop.permute.xlu0 %2828
        %2832 = vrot.lane.b32.xlu0 %v2780, 104
        %v2833 = vpop.permute.xlu0 %2832
        %2836 = vrot.lane.b32.xlu0 %v2781, 112
        %v2837 = vpop.permute.xlu0 %2836
        %2840 = vrot.lane.b32.xlu0 %v2782, 120
        %v2841 = vpop.permute.xlu0 %2840
        %v2843 = vsel %vm1735, %v2639, %v2785
        %v2844 = vsel %vm1248, %v2843, %v2789
        %vm2845 = vcmask 195584
        %v2846 = vsel %vm2845, %v2844, %v2793
        %v2847 = vsel %vm1337, %v2846, %v2797
        %vm2848 = vcmask 326656
        %v2849 = vsel %vm2848, %v2847, %v2801
        %vm2850 = vcmask 392192
        %v2851 = vsel %vm2850, %v2849, %v2805
        %vm2852 = vcmask 457728
        %v2853 = vsel %vm2852, %v2851, %v2809
        %vm2854 = vcmask 523264
        %v2855 = vsel %vm2854, %v2853, %v2813
        %vm2856 = vcmask 588800
        %v2857 = vsel %vm2856, %v2855, %v2817
        %vm2858 = vcmask 654336
        %v2859 = vsel %vm2858, %v2857, %v2821
        %vm2860 = vcmask 719872
        %v2861 = vsel %vm2860, %v2859, %v2825
        %vm2862 = vcmask 785408
        %v2863 = vsel %vm2862, %v2861, %v2829
        %vm2864 = vcmask 850944
        %v2865 = vsel %vm2864, %v2863, %v2833
        %vm2866 = vcmask 916480
        %v2867 = vsel %vm2866, %v2865, %v2837
        %vm2868 = vcmask 982016
        %v2869 = vsel %vm2868, %v2867, %v2841
        %2870 = vst [vmem:[%s324] sm:$0xff] %v2869
        %s2871 = sand.u32 %s196, 1
        %s2872 = scalar_lea.sflag [#allocation3], %s2871
        %s2873 = sand.u32 %s196, 1
        %s2874 = smul.addr %s2873, 8
        %s2875 = scalar_lea.vmem [#allocation2], %s2874
        // Predicated region
        $region49: #{tpu_custom_call.1} parent=47 // pred_check
          %p2876 = pneg %p206
        $region50: #{tpu_custom_call.1} parent=47 // pred_check_branch
          %2878 = sbr.rel (%p2876) target = $region52
        $region51: #{tpu_custom_call.1} parent=47 // pred_region
          %s2880 = ssub.s32 128, 128
          %2881 = vsyncadd %s2872, %s2880
          %s2882 = smul.addr %s21, 128
          %s2883 = scalar_lea.hbm %s7, %s2882
          %s2885 = sshll.u32 %s2875, 4
          %s2886 = int_to_ptr.vmem [resolvable:$true] %s2885
          %2888 = dma.vmem_to_hbm [thread:$0]  %s2886, 128, %s2883, %s2872
        $region52: #{tpu_custom_call.1} parent=47 // pred_fallthru
          _
      $region48: #{tpu_custom_call.1} parent=5 // pred_fallthru
        _
      %p2889 = scmp.le.s32.totalorder 2, %s16
      // Predicated region
      $region53: #{tpu_custom_call.1} parent=5 // pred_check
        %p2890 = pneg %p2889
      $region54: #{tpu_custom_call.1} parent=5 // pred_check_branch
        %2892 = sbr.rel (%p2890) target = $region56
      $region55: #{tpu_custom_call.1} parent=5 // pred_region
        %s2893 = ssub.s32 %s16, 2
        // Predicated region
        $region57: #{tpu_custom_call.1} parent=55 // pred_check
          %p2894 = pneg %p212
        $region58: #{tpu_custom_call.1} parent=55 // pred_check_branch
          %2896 = sbr.rel (%p2894) target = $region60
        $region59: #{tpu_custom_call.1} parent=55 // pred_region
          %s2897 = sand.u32 %s197, 1
          %s2898 = scalar_lea.sflag [#allocation3], %s2897
          %s2899 = sand.u32 %s197, 1
          %s2900 = smul.addr %s2899, 8
          %s2901 = scalar_lea.vmem [#allocation2], %s2900
          %2902 = dma.done %s2898, 128
        $region60: #{tpu_custom_call.1} parent=55 // pred_fallthru
          _
      $region56: #{tpu_custom_call.1} parent=5 // pred_fallthru
        _
    $region6: #{tpu_custom_call.1} parent=1 // loop_footer
      %s20 = sadd.s32 1, %s16
    $region7: #{tpu_custom_call.1} parent=1 // loop_footer_branch
      %15 = sbr.rel target = $region3
    $region8: #{tpu_custom_call.1} parent=1 // loop_exit
      _
    %2903 = vsyncpa [#allocation3], 1
    %s2904 = scalar_lea.sflag [#allocation3], 1
    %2905 = vsyncpa %s2904, 1

</llo_original>
